<compile_context>
chip_gen: v7x
topology: tpu7x:2x2x1
jax: 0.10.0
libtpu: 0.0.40
codegen_flags: <defaults>
</compile_context>

<pallas_src>
import functools

import jax
import jax.numpy as jnp
from jax import lax
from jax.experimental import pallas as pl
from jax.experimental.pallas import tpu as pltpu


def _vmem_capacity_bytes():
    """Physical VMEM of the local TPU generation (conservative fallback)."""
    try:
        return int(pltpu.get_tpu_info().vmem_capacity_bytes)
    except Exception:
        return 64 << 20  # v7x physical size; safe lower bound everywhere


def _pick_spatial_tile(S, row_bytes, budget_bytes):
    """Pick a lane tile over the flattened spatial extent S.

    row_bytes = bytes per spatial column of the (double-buffered) pass-1
    working set.  Returns (tS, num_tiles, needs_mask)."""
    if S <= 128 or S * row_bytes <= budget_bytes:
        return S, 1, False                      # whole extent in one block
    tS = max(128, ((budget_bytes // row_bytes) // 128) * 128)
    tS = min(tS, max(128, (S // 128) * 128))    # keep 128-aligned, <= S
    num_tiles = -(-S // tS)
    return tS, num_tiles, (S % tS) != 0


def _fold_lanes_to_128(v):
    """(rows, W) f32 -> (rows, 128) f32 with the same total lane sum."""
    rows, w = v.shape
    if w % 128 == 0 and w >= 128:
        acc = v[:, 0:128]
        for k in range(1, w // 128):
            acc = acc + v[:, k * 128:(k + 1) * 128]
        return acc
    # ragged / sub-128 tile: full cross-lane reduce, parked in lane 0
    total = jnp.sum(v, axis=-1, keepdims=True)            # (rows, 1)
    lane = lax.broadcasted_iota(jnp.int32, (rows, 128), 1)
    return jnp.where(lane == 0, total, 0.0)


def _fused_stats_copy_kernel(x_ref, out_ref, part_ref, *, G, M, F, c, C, S,
                             tS, needs_mask, n_spp):
    """Copy one spatial tile of x into the output and accumulate std partials.

    x_ref   : (N, C, tS)        input tile (natural layout, input dtype)
    out_ref : (N, C+F, tS)      output tile; channels [0, C) get x, the F
                                broadcast channels get a placeholder here
    part_ref: (1, F*M, 128) f32 partition-resident partial-sum accumulator
    """
    p = pl.program_id(0)
    s = pl.program_id(1)

    x = x_ref[...]                                        # (N, C, tS)

    # ---- passthrough copy (pass 2 overwrites the F extra channels) ----
    out_ref[:, :C, :] = x
    out_ref[:, C:, :] = jnp.zeros(
        (x.shape[0], out_ref.shape[1] - C, x.shape[2]), dtype=out_ref.dtype)

    # ---- group statistics: single-pass variance over the group axis ----
    xf = x.astype(jnp.float32)
    s1 = xf[0:M]
    s2 = xf[0:M] * xf[0:M]
    for g in range(1, G):                                 # unrolled VALU adds
        blk = xf[g * M:(g + 1) * M]
        s1 = s1 + blk
        s2 = s2 + blk * blk
    mean = s1 * (1.0 / G)
    var = s2 * (1.0 / G) - mean * mean
    std = jnp.sqrt(jnp.maximum(var, 0.0) + 1e-8)          # (M, C, tS)

    if needs_mask:
        # ragged last spatial tile: zero the out-of-range lanes so they do
        # not contribute to the spatial mean (divisor in the glue is true L).
        t = p * n_spp + s
        lane = lax.broadcasted_iota(jnp.int32, std.shape, 2)
        std = jnp.where(lane < (S - t * tS), std, 0.0)

    @pl.when(s == 0)
    def _init():
        part_ref[...] = jnp.zeros_like(part_ref)

    # fold channels of each f-group and the lanes into the 128-wide accumulator
    for f in range(F):
        folded = _fold_lanes_to_128(
            jnp.sum(std[:, f * c:(f + 1) * c, :], axis=1))   # (M, 128)
        part_ref[0, f * M:(f + 1) * M, :] += folded


def _fill_kernel(y_ref, buf_ref, out_ref, bcast_ref, sem, *, C, F, S, tF):
    """Fill channels [C, C+F) of the aliased output with the broadcast stat.

    y_ref  : (N, F, 1) VMEM, already in the output dtype
    buf_ref: aliased (N, C+F, S) HBM buffer (only here to carry the aliasing)
    out_ref: (N, C+F, S) HBM buffer (== buf_ref), written via strided DMAs
    """
    del buf_ref
    bcast_ref[...] = jnp.broadcast_to(y_ref[...], bcast_ref.shape)  # (N,F,tF)

    n_full = S // tF
    if n_full > 0:
        @pl.loop(0, n_full)
        def _copy(i):
            start = i * tF
            if tF % 128 == 0:
                start = pl.multiple_of(start, 128)
            cp = pltpu.make_async_copy(
                bcast_ref, out_ref.at[:, C:C + F, pl.ds(start, tF)], sem)
            cp.start()
            cp.wait()

    tail = S - n_full * tF
    if tail > 0:
        cp = pltpu.make_async_copy(
            bcast_ref.at[:, :, 0:tail],
            out_ref.at[:, C:C + F, n_full * tF:S], sem)
        cp.start()
        cp.wait()


def _minibatch_std_impl(x, group_size, num_channels, tile_budget_bytes):
    N, C, H, W, D = x.shape
    G = int(min(group_size, N)) if group_size is not None else N
    F = int(num_channels)
    assert N % G == 0, "batch size must be divisible by the group size"
    assert C % F == 0, "channels must be divisible by num_channels"
    M = N // G
    c = C // F
    S = H * W * D
    itemsize = jnp.dtype(x.dtype).itemsize

    cap = _vmem_capacity_bytes()
    if tile_budget_bytes is None:
        # keep the double-buffered working set well inside the scoped limit
        # on every generation (v7x: 64 MiB physical / 32 MiB scoped default).
        budget = min(cap // 4, 24 << 20)
    else:
        budget = int(tile_budget_bytes)

    # bytes per spatial column of the pass-1 working set:
    # double-buffered input (N*C) + output (N*(C+F)) blocks.
    row_bytes = 2 * N * (2 * C + F) * itemsize
    tS, nT, needs_mask = _pick_spatial_tile(S, row_bytes, budget)

    # Split the reduction into P partitions so v7x's two TensorCores both work.
    P = 2 if (nT >= 2 and nT % 2 == 0) else 1
    n_spp = nT // P

    needed = row_bytes * tS + 2 * P * F * M * 128 * 4 + (4 << 20)
    vmem_limit = int(min(max(needed, 32 << 20), max(cap - (4 << 20), 16 << 20)))

    # ------------- pass 1: fused passthrough copy + std partial sums ---------
    x_nc = x.reshape(N, C, S)
    spatial_map = lambda p, s: (0, 0, p * n_spp + s)

    big, part = pl.pallas_call(
        functools.partial(_fused_stats_copy_kernel, G=G, M=M, F=F, c=c, C=C,
                          S=S, tS=tS, needs_mask=needs_mask, n_spp=n_spp),
        out_shape=(
            jax.ShapeDtypeStruct((N, C + F, S), x.dtype),
            jax.ShapeDtypeStruct((P, F * M, 128), jnp.float32),
        ),
        grid=(P, n_spp),
        in_specs=[pl.BlockSpec((N, C, tS), spatial_map)],
        out_specs=(
            pl.BlockSpec((N, C + F, tS), spatial_map),
            pl.BlockSpec((1, F * M, 128), lambda p, s: (p, 0, 0)),
        ),
        compiler_params=pltpu.CompilerParams(
            dimension_semantics=("parallel", "arbitrary"),
            vmem_limit_bytes=vmem_limit),
    )(x_nc)

    # ------------- tiny glue: finish the reduction, order rows, cast once ----
    stat = part.sum(axis=(0, 2)) * (1.0 / float(c * S))        # (F*M,)
    stat = jnp.transpose(stat.reshape(F, M))                   # (M, F)
    y_rows = jnp.tile(stat, (G, 1)).astype(x.dtype).reshape(N, F, 1)

    # ------------- pass 2: fill the F broadcast channels in-place ------------
    lanes = max(1, (2 << 20) // max(1, N * F * itemsize))
    tF = min(S, lanes)
    if tF < S and tF >= 128:
        tF = (tF // 128) * 128

    out = pl.pallas_call(
        functools.partial(_fill_kernel, C=C, F=F, S=S, tF=tF),
        out_shape=jax.ShapeDtypeStruct((N, C + F, S), x.dtype),
        grid=(1,),
        in_specs=[
            pl.BlockSpec((N, F, 1), lambda i: (0, 0, 0)),
            pl.BlockSpec(memory_space=pl.ANY),
        ],
        out_specs=pl.BlockSpec(memory_space=pl.ANY),
        scratch_shapes=[pltpu.VMEM((N, F, tF), x.dtype),
                        pltpu.SemaphoreType.DMA(())],
        input_output_aliases={1: 0},
        compiler_params=pltpu.CompilerParams(
            dimension_semantics=("arbitrary",)),
    )(y_rows, big)

    return out.reshape(N, C + F, H, W, D)


_minibatch_std_jit = jax.jit(_minibatch_std_impl, static_argnums=(1, 2, 3))


def minibatch_std_layer(x, group_size, num_channels=1, tile_budget_bytes=None):
    """x: (N, C, H, W, D) -> (N, C + num_channels, H, W, D)."""
    return _minibatch_std_jit(x, group_size, num_channels, tile_budget_bytes)


def _reference(x, group_size, num_channels=1):
    # Pure-JAX transcription of the PyTorch forward (for verification).
    N, C, H, W, D = x.shape
    G = min(group_size, N) if group_size is not None else N
    F = num_channels
    c = C // F
    y = x.reshape(G, -1, F, c, H, W, D).astype(jnp.float32)
    y = y - y.mean(axis=0)
    y = jnp.mean(jnp.square(y), axis=0)
    y = jnp.sqrt(y + 1e-8)
    y = y.mean(axis=(2, 3, 4, 5))                      # (M, F)
    y = y.reshape(-1, F, 1, 1, 1)
    y = jnp.tile(y, (G, 1, H, W, D)).astype(x.dtype)   # (N, F, H, W, D)
    return jnp.concatenate([x, y], axis=1)


if __name__ == "__main__":
    key = jax.random.PRNGKey(0)

    # Main check: small 5D shape, fused single-tile fast path.
    N, C, H, W, D = 4, 4, 8, 16, 16
    group_size, num_channels = 2, 1
    x = jax.random.normal(key, (N, C, H, W, D), dtype=jnp.float32)

    out = jax.block_until_ready(minibatch_std_layer(x, group_size, num_channels))
    ref = _reference(x, group_size, num_channels)
    assert out.shape == (N, C + num_channels, H, W, D)
    assert jnp.allclose(out, ref, atol=1e-5, rtol=1e-5), float(
        jnp.max(jnp.abs(out - ref)))

    # Secondary check: non-128-divisible spatial extent (S = 210), two stat
    # channels, and a tiny tile budget to exercise the multi-tile, masked
    # last tile and 2-partition code paths.
    x2 = jax.random.normal(jax.random.PRNGKey(1), (4, 4, 5, 6, 7),
                           dtype=jnp.float32)
    out2 = jax.block_until_ready(minibatch_std_layer(x2, 2, 2, 4096))
    ref2 = _reference(x2, 2, 2)
    assert out2.shape == (4, 6, 5, 6, 7)
    assert jnp.allclose(out2, ref2, atol=1e-5, rtol=1e-5), float(
        jnp.max(jnp.abs(out2 - ref2)))

    print("KERNEL_OK")
</pallas_src>

<mosaic_0001>
module attributes {stable_mosaic.version = 11 : i64} {
  func.func @_fused_stats_copy_kernel(%arg0: i32, %arg1: i32, %arg2: memref<4x4x2048xf32, #tpu.memory_space<vmem>>, %arg3: memref<4x5x2048xf32, #tpu.memory_space<vmem>>, %arg4: memref<1x2x128xf32, #tpu.memory_space<vmem>>) attributes {dimension_semantics = [#tpu.dimension_semantics<parallel>, #tpu.dimension_semantics<arbitrary>], iteration_bounds = array<i64: 1, 1>, scalar_prefetch = 0 : i64, scratch_operands = 0 : i64, tpu.core_type = #tpu.core_type<tc>, window_params = [{transform_indices = @transform_0, window_bounds = array<i64: 4, 4, 2048>}, {transform_indices = @transform_1, window_bounds = array<i64: 4, 5, 2048>}, {transform_indices = @transform_2, window_bounds = array<i64: 1, 2, 128>}]} {
    %c0 = arith.constant 0 : index
    %c0_0 = arith.constant 0 : index
    %c0_1 = arith.constant 0 : index
    %0 = vector.load %arg2[%c0, %c0_0, %c0_1] : memref<4x4x2048xf32, #tpu.memory_space<vmem>>, vector<4x4x2048xf32>
    %c0_2 = arith.constant 0 : index
    %c0_3 = arith.constant 0 : index
    %c0_4 = arith.constant 0 : index
    %1 = vector.load %arg3[%c0_2, %c0_3, %c0_4] : memref<4x5x2048xf32, #tpu.memory_space<vmem>>, vector<4x4x2048xf32>
    tpu.vector_store %arg3[%c0_2, %c0_3, %c0_4], %0 {strides = array<i32>} : memref<4x5x2048xf32, #tpu.memory_space<vmem>>, vector<4x4x2048xf32>,
    %cst = arith.constant 0.000000e+00 : f32
    %2 = vector.broadcast %cst : f32 to vector<4x1x2048xf32>
    %c0_5 = arith.constant 0 : index
    %c4 = arith.constant 4 : index
    %c0_6 = arith.constant 0 : index
    %3 = vector.load %arg3[%c0_5, %c4, %c0_6] : memref<4x5x2048xf32, #tpu.memory_space<vmem>>, vector<4x1x2048xf32>
    tpu.vector_store %arg3[%c0_5, %c4, %c0_6], %2 {strides = array<i32>} : memref<4x5x2048xf32, #tpu.memory_space<vmem>>, vector<4x1x2048xf32>,
    %4 = vector.extract_strided_slice %0 {offsets = [0, 0, 0], sizes = [2, 4, 2048], strides = [1, 1, 1]} : vector<4x4x2048xf32> to vector<2x4x2048xf32>
    %5 = vector.extract_strided_slice %0 {offsets = [0, 0, 0], sizes = [2, 4, 2048], strides = [1, 1, 1]} : vector<4x4x2048xf32> to vector<2x4x2048xf32>
    %6 = vector.extract_strided_slice %0 {offsets = [0, 0, 0], sizes = [2, 4, 2048], strides = [1, 1, 1]} : vector<4x4x2048xf32> to vector<2x4x2048xf32>
    %7 = arith.mulf %5, %6 : vector<2x4x2048xf32>
    %8 = vector.extract_strided_slice %0 {offsets = [2, 0, 0], sizes = [2, 4, 2048], strides = [1, 1, 1]} : vector<4x4x2048xf32> to vector<2x4x2048xf32>
    %9 = arith.addf %4, %8 : vector<2x4x2048xf32>
    %10 = arith.mulf %8, %8 : vector<2x4x2048xf32>
    %11 = arith.addf %7, %10 : vector<2x4x2048xf32>
    %cst_7 = arith.constant 5.000000e-01 : f32
    %12 = vector.broadcast %cst_7 : f32 to vector<2x4x2048xf32>
    %13 = arith.mulf %9, %12 : vector<2x4x2048xf32>
    %cst_8 = arith.constant 5.000000e-01 : f32
    %14 = vector.broadcast %cst_8 : f32 to vector<2x4x2048xf32>
    %15 = arith.mulf %11, %14 : vector<2x4x2048xf32>
    %16 = arith.mulf %13, %13 : vector<2x4x2048xf32>
    %17 = arith.subf %15, %16 : vector<2x4x2048xf32>
    %cst_9 = arith.constant 0.000000e+00 : f32
    %18 = vector.broadcast %cst_9 : f32 to vector<2x4x2048xf32>
    %19 = arith.maximumf %17, %18 : vector<2x4x2048xf32>
    %cst_10 = arith.constant 9.99999993E-9 : f32
    %20 = vector.broadcast %cst_10 : f32 to vector<2x4x2048xf32>
    %21 = arith.addf %19, %20 : vector<2x4x2048xf32>
    %22 = math.sqrt %21 : vector<2x4x2048xf32>
    %c0_i32 = arith.constant 0 : i32
    %23 = arith.cmpi eq, %arg1, %c0_i32 : i32
    %24 = arith.extui %23 : i1 to i32
    %c0_i32_11 = arith.constant 0 : i32
    %25 = arith.cmpi ne, %24, %c0_i32_11 : i32
    scf.if %25 {
      %cst_19 = arith.constant 0.000000e+00 : f32
      %64 = vector.broadcast %cst_19 : f32 to vector<1x2x128xf32>
      %c0_20 = arith.constant 0 : index
      %c0_21 = arith.constant 0 : index
      %c0_22 = arith.constant 0 : index
      %65 = vector.load %arg4[%c0_20, %c0_21, %c0_22] : memref<1x2x128xf32, #tpu.memory_space<vmem>>, vector<1x2x128xf32>
      tpu.vector_store %arg4[%c0_20, %c0_21, %c0_22], %64 {strides = array<i32>} : memref<1x2x128xf32, #tpu.memory_space<vmem>>, vector<1x2x128xf32>,
    } else {
    }
    %cst_12 = arith.constant dense<0.000000e+00> : vector<2x2048xf32>
    %26 = vector.multi_reduction <add>, %22, %cst_12 [1] : vector<2x4x2048xf32> to vector<2x2048xf32>
    %27 = vector.extract_strided_slice %26 {offsets = [0, 0], sizes = [2, 128], strides = [1, 1]} : vector<2x2048xf32> to vector<2x128xf32>
    %28 = vector.extract_strided_slice %26 {offsets = [0, 128], sizes = [2, 128], strides = [1, 1]} : vector<2x2048xf32> to vector<2x128xf32>
    %29 = arith.addf %27, %28 : vector<2x128xf32>
    %30 = vector.extract_strided_slice %26 {offsets = [0, 256], sizes = [2, 128], strides = [1, 1]} : vector<2x2048xf32> to vector<2x128xf32>
    %31 = arith.addf %29, %30 : vector<2x128xf32>
    %32 = vector.extract_strided_slice %26 {offsets = [0, 384], sizes = [2, 128], strides = [1, 1]} : vector<2x2048xf32> to vector<2x128xf32>
    %33 = arith.addf %31, %32 : vector<2x128xf32>
    %34 = vector.extract_strided_slice %26 {offsets = [0, 512], sizes = [2, 128], strides = [1, 1]} : vector<2x2048xf32> to vector<2x128xf32>
    %35 = arith.addf %33, %34 : vector<2x128xf32>
    %36 = vector.extract_strided_slice %26 {offsets = [0, 640], sizes = [2, 128], strides = [1, 1]} : vector<2x2048xf32> to vector<2x128xf32>
    %37 = arith.addf %35, %36 : vector<2x128xf32>
    %38 = vector.extract_strided_slice %26 {offsets = [0, 768], sizes = [2, 128], strides = [1, 1]} : vector<2x2048xf32> to vector<2x128xf32>
    %39 = arith.addf %37, %38 : vector<2x128xf32>
    %40 = vector.extract_strided_slice %26 {offsets = [0, 896], sizes = [2, 128], strides = [1, 1]} : vector<2x2048xf32> to vector<2x128xf32>
    %41 = arith.addf %39, %40 : vector<2x128xf32>
    %42 = vector.extract_strided_slice %26 {offsets = [0, 1024], sizes = [2, 128], strides = [1, 1]} : vector<2x2048xf32> to vector<2x128xf32>
    %43 = arith.addf %41, %42 : vector<2x128xf32>
    %44 = vector.extract_strided_slice %26 {offsets = [0, 1152], sizes = [2, 128], strides = [1, 1]} : vector<2x2048xf32> to vector<2x128xf32>
    %45 = arith.addf %43, %44 : vector<2x128xf32>
    %46 = vector.extract_strided_slice %26 {offsets = [0, 1280], sizes = [2, 128], strides = [1, 1]} : vector<2x2048xf32> to vector<2x128xf32>
    %47 = arith.addf %45, %46 : vector<2x128xf32>
    %48 = vector.extract_strided_slice %26 {offsets = [0, 1408], sizes = [2, 128], strides = [1, 1]} : vector<2x2048xf32> to vector<2x128xf32>
    %49 = arith.addf %47, %48 : vector<2x128xf32>
    %50 = vector.extract_strided_slice %26 {offsets = [0, 1536], sizes = [2, 128], strides = [1, 1]} : vector<2x2048xf32> to vector<2x128xf32>
    %51 = arith.addf %49, %50 : vector<2x128xf32>
    %52 = vector.extract_strided_slice %26 {offsets = [0, 1664], sizes = [2, 128], strides = [1, 1]} : vector<2x2048xf32> to vector<2x128xf32>
    %53 = arith.addf %51, %52 : vector<2x128xf32>
    %54 = vector.extract_strided_slice %26 {offsets = [0, 1792], sizes = [2, 128], strides = [1, 1]} : vector<2x2048xf32> to vector<2x128xf32>
    %55 = arith.addf %53, %54 : vector<2x128xf32>
    %56 = vector.extract_strided_slice %26 {offsets = [0, 1920], sizes = [2, 128], strides = [1, 1]} : vector<2x2048xf32> to vector<2x128xf32>
    %57 = arith.addf %55, %56 : vector<2x128xf32>
    %c0_13 = arith.constant 0 : index
    %c0_14 = arith.constant 0 : index
    %c0_15 = arith.constant 0 : index
    %58 = vector.load %arg4[%c0_13, %c0_14, %c0_15] : memref<1x2x128xf32, #tpu.memory_space<vmem>>, vector<1x2x128xf32>
    %59 = vector.shape_cast %58 : vector<1x2x128xf32> to vector<2x128xf32>
    %60 = arith.addf %59, %57 : vector<2x128xf32>
    %c0_16 = arith.constant 0 : index
    %c0_17 = arith.constant 0 : index
    %c0_18 = arith.constant 0 : index
    %61 = vector.load %arg4[%c0_16, %c0_17, %c0_18] : memref<1x2x128xf32, #tpu.memory_space<vmem>>, vector<1x2x128xf32>
    %62 = vector.shape_cast %61 : vector<1x2x128xf32> to vector<2x128xf32>
    %63 = vector.shape_cast %60 : vector<2x128xf32> to vector<1x2x128xf32>
    tpu.vector_store %arg4[%c0_16, %c0_17, %c0_18], %63 {strides = array<i32>} : memref<1x2x128xf32, #tpu.memory_space<vmem>>, vector<1x2x128xf32>,
    return
  }
  func.func @transform_0(%arg0: i32, %arg1: i32) -> (i32, i32, i32) {
    %c1_i32 = arith.constant 1 : i32
    %0 = arith.muli %arg0, %c1_i32 : i32
    %1 = arith.addi %0, %arg1 : i32
    %c0_i32 = arith.constant 0 : i32
    %c0_i32_0 = arith.constant 0 : i32
    %c0_i32_1 = arith.constant 0 : i32
    return %c0_i32, %c0_i32_0, %1 : i32, i32, i32
  }
  func.func @transform_1(%arg0: i32, %arg1: i32) -> (i32, i32, i32) {
    %c1_i32 = arith.constant 1 : i32
    %0 = arith.muli %arg0, %c1_i32 : i32
    %1 = arith.addi %0, %arg1 : i32
    %c0_i32 = arith.constant 0 : i32
    %c0_i32_0 = arith.constant 0 : i32
    %c0_i32_1 = arith.constant 0 : i32
    return %c0_i32, %c0_i32_0, %1 : i32, i32, i32
  }
  func.func @transform_2(%arg0: i32, %arg1: i32) -> (i32, i32, i32) {
    %c0_i32 = arith.constant 0 : i32
    %c0_i32_0 = arith.constant 0 : i32
    %c0_i32_1 = arith.constant 0 : i32
    return %arg0, %c0_i32, %c0_i32_0 : i32, i32, i32
  }
}

module attributes {stable_mosaic.version = 11 : i64} {
  func.func @_fill_kernel(%arg0: i32, %arg1: memref<4x1x1xf32, #tpu.memory_space<vmem>>, %arg2: memref<4x5x2048xf32, #tpu.memory_space<any>>, %arg3: memref<4x5x2048xf32, #tpu.memory_space<any>>, %arg4: memref<4x1x2048xf32, #tpu.memory_space<vmem>>, %arg5: memref<!tpu.dma_semaphore, #tpu.memory_space<semaphore_mem>>) attributes {dimension_semantics = [#tpu.dimension_semantics<arbitrary>], iteration_bounds = array<i64: 1>, scalar_prefetch = 0 : i64, scratch_operands = 2 : i64, tpu.core_type = #tpu.core_type<tc>, window_params = [{pipeline_mode = #tpu.pipeline_mode<synchronous>, transform_indices = @transform_0, window_bounds = array<i64: 4, 1, 1>}, {}, {}]} {
    %c0 = arith.constant 0 : index
    %c0_0 = arith.constant 0 : index
    %c0_1 = arith.constant 0 : index
    %0 = vector.load %arg1[%c0, %c0_0, %c0_1] : memref<4x1x1xf32, #tpu.memory_space<vmem>>, vector<4x1x1xf32>
    %1 = vector.shape_cast %0 : vector<4x1x1xf32> to vector<4x1x1xf32>
    %2 = vector.broadcast %1 : vector<4x1x1xf32> to vector<4x1x2048xf32>
    %c0_2 = arith.constant 0 : index
    %c0_3 = arith.constant 0 : index
    %c0_4 = arith.constant 0 : index
    %3 = vector.load %arg4[%c0_2, %c0_3, %c0_4] : memref<4x1x2048xf32, #tpu.memory_space<vmem>>, vector<4x1x2048xf32>
    tpu.vector_store %arg4[%c0_2, %c0_3, %c0_4], %2 {strides = array<i32>} : memref<4x1x2048xf32, #tpu.memory_space<vmem>>, vector<4x1x2048xf32>,
    %c0_i32 = arith.constant 0 : i32
    %c1_i32 = arith.constant 1 : i32
    %4 = arith.muli %c0_i32, %c1_i32 : i32
    %c0_i32_5 = arith.constant 0 : i32
    %5 = arith.addi %c0_i32_5, %4 : i32
    %c2048_i32 = arith.constant 2048 : i32
    %6 = arith.muli %5, %c2048_i32 : i32
    %7 = tpu.assume_multiple %6, 128 : i32
    %c0_i32_6 = arith.constant 0 : i32
    %c4_i32 = arith.constant 4 : i32
    %8 = tpu.memref_slice %arg3[%c0_i32_6, %c4_i32, %7] : memref<4x5x2048xf32, #tpu.memory_space<any>> -> memref<4x1x2048xf32, #tpu.memory_space<any>>
    tpu.enqueue_dma source(%arg4 : memref<4x1x2048xf32, #tpu.memory_space<vmem>>) target(%8 : memref<4x1x2048xf32, #tpu.memory_space<any>>) target_semaphore(%arg5 : memref<!tpu.dma_semaphore, #tpu.memory_space<semaphore_mem>>)
    %c0_i32_7 = arith.constant 0 : i32
    %c4_i32_8 = arith.constant 4 : i32
    %9 = tpu.memref_slice %arg3[%c0_i32_7, %c4_i32_8, %7] : memref<4x5x2048xf32, #tpu.memory_space<any>> -> memref<4x1x2048xf32, #tpu.memory_space<any>>
    tpu.wait_dma2 semaphore(%arg5 : memref<!tpu.dma_semaphore, #tpu.memory_space<semaphore_mem>>) src(%arg4 : memref<4x1x2048xf32, #tpu.memory_space<vmem>>) dst(%9 : memref<4x1x2048xf32, #tpu.memory_space<any>>)
    %c1_i32_9 = arith.constant 1 : i32
    return
  }
  func.func @transform_0(%arg0: i32) -> (i32, i32, i32) {
    %c0_i32 = arith.constant 0 : i32
    %c0_i32_0 = arith.constant 0 : i32
    %c0_i32_1 = arith.constant 0 : i32
    %c0_i32_2 = arith.constant 0 : i32
    return %c0_i32, %c0_i32_0, %c0_i32_1 : i32, i32, i32
  }
}

</mosaic_0001>

<llo_original>
// kernel: _minibatch_std_impl.3
$region0: #{_minibatch_std_impl.3}
  #allocation0 [shape = 'u32[]', space=smem, size = 0x4, offset = 0x4, fixed_abs, tag = 'smem constant byte address 0x4 - core index']
  #allocation1 [shape = 'u32[144,128]{1,0:T(1,128)}', space=vmem, size = 0x12000, scoped, tag = 'internal scratch']
  #allocation2 [shape = 'f32[4,1,2048]{2,1,0:T(1,128)}', space=vmem, size = 0x8000, scoped, tag = 'scratch operand']
  #allocation3 [shape = 's32[1]{0}', space=sflag, size = 0x4, scoped, tag = 'scratch operand']
  #allocation4 [shape = 's32[]', space=sflag, size = 0x4, offset = 0, fixed_abs, tag = 'sflag constant byte address 0x0 - dummy sync flag']
  %s0 = inlined_call_operand.vmem [shape: f32[4,1,1], index: 0, kind: input, shape index: {}]
  %s1 = inlined_call_operand.vmem [shape: f32[4,5,2048], index: 1, kind: input, shape index: {}, may-alias: {1,2}]
  %s2 = inlined_call_operand.vmem [shape: f32[4,5,2048], index: 2, kind: output, shape index: {}, may-alias: {1,2}]
  %s3 = sld [smem:[#allocation0]]
  $region43: #{_minibatch_std_impl.3} parent=0
    _
  %s5 = ssub.s32 1, %s3
  %s6 = scalar_select 0, %s5, %s3
  // Predicated region
  $region2: #{_minibatch_std_impl.3} parent=0 // pred_check
    _
  $region3: #{_minibatch_std_impl.3} parent=0 // pred_check_branch
    %8 = sbr.rel (0) target = $region5
  $region4: #{_minibatch_std_impl.3} parent=0 // pred_region
    _
  $region5: #{_minibatch_std_impl.3} parent=0 // pred_fallthru
    _
  %v9 = vld [vmem:[%s0] sm:$0x1]
  %v10 = vld [vmem:[%s0 + $0x1] sm:$0x1]
  %v11 = vld [vmem:[%s0 + $0x2] sm:$0x1]
  %v12 = vld [vmem:[%s0 + $0x3] sm:$0x1]
  %14 = vset.pattern.permute.xlu0 0
  %15 = vperm.xlu0 %14, %v9
  %v16 = vpop.permute.xlu0 %15
  %v18 = vlaneseq
  %v19 = vshrl.u32 %v18, 7
  %v20 = vsub.s32 0, %v19
  %v21 = vrot.slane %v16, %v20
  %23 = vset.pattern.permute.xlu0 0
  %24 = vperm.xlu0 %23, %v10
  %v25 = vpop.permute.xlu0 %24
  %v27 = vlaneseq
  %v28 = vshrl.u32 %v27, 7
  %v29 = vsub.s32 0, %v28
  %v30 = vrot.slane %v25, %v29
  %32 = vset.pattern.permute.xlu0 0
  %33 = vperm.xlu0 %32, %v11
  %v34 = vpop.permute.xlu0 %33
  %v36 = vlaneseq
  %v37 = vshrl.u32 %v36, 7
  %v38 = vsub.s32 0, %v37
  %v39 = vrot.slane %v34, %v38
  %41 = vset.pattern.permute.xlu0 0
  %42 = vperm.xlu0 %41, %v12
  %v43 = vpop.permute.xlu0 %42
  %v45 = vlaneseq
  %v46 = vshrl.u32 %v45, 7
  %v47 = vsub.s32 0, %v46
  %v48 = vrot.slane %v43, %v47
  %49 = vst [vmem:[#allocation2] sm:$0xff] %v21
  %50 = vst [vmem:[#allocation2 + $0x8] sm:$0xff] %v21
  %51 = vst [vmem:[#allocation2 + $0x10] sm:$0xff] %v30
  %52 = vst [vmem:[#allocation2 + $0x18] sm:$0xff] %v30
  %53 = vst [vmem:[#allocation2 + $0x20] sm:$0xff] %v39
  %54 = vst [vmem:[#allocation2 + $0x28] sm:$0xff] %v39
  %55 = vst [vmem:[#allocation2 + $0x30] sm:$0xff] %v48
  %56 = vst [vmem:[#allocation2 + $0x38] sm:$0xff] %v48
  %s57 = smul.u32 0, 8
  %s58 = sadd.s32 %s57, 4
  %s59 = scalar_lea.vmem %s2, %s58
  %p61 = scmp.lt.u32.totalorder 1, 8
  %p62 = pneg %p61
  // Predicated region
  $region6: #{_minibatch_std_impl.3} parent=0 // pred_check
    _
  $region7: #{_minibatch_std_impl.3} parent=0 // pred_check_branch
    %64 = sbr.rel (%p61) target = $region9
  $region8: #{_minibatch_std_impl.3} parent=0 // pred_region
    %s205 = sand.u32 1, 7
    %p206 = scmp.eq.s32.totalorder %s205, 0
    %p207 = pneg %p206
    // Predicated region
    $region21: #{_minibatch_std_impl.3} parent=8 // pred_check
      _
    $region22: #{_minibatch_std_impl.3} parent=8 // pred_check_branch
      %209 = sbr.rel (%p206) target = $region24
    $region23: #{_minibatch_std_impl.3} parent=8 // pred_region
      %s210 = sand.u32 1, 7
      %s211 = ssub.s32 1, %s210
      %s212 = scalar_lea.vmem [#allocation2], %s211
      %s213 = ssub.s32 1, %s210
      %s214 = scalar_lea.vmem %s59, %s213
      loop: start=0, step=1, limit=1
      $region25: #{_minibatch_std_impl.3} parent=23 // loop_pre_header
        _
      $region26: #{_minibatch_std_impl.3} parent=23 // loop_header
        %s216 = sphi 0, %s220
        %p217 = scmp.ge.s32.totalorder %s216, 1
        %s221 = sphi [#allocation2], [#allocation2]
        %s222 = sphi %s59, %s59
      $region27: #{_minibatch_std_impl.3} parent=23 // loop_header_branch
        %219 = sbr.rel (%p217) target = $region31
      $region28: #{_minibatch_std_impl.3} parent=23 // loop_body
        _
      $region29: #{_minibatch_std_impl.3} parent=23 // loop_footer
        %s220 = sadd.s32 1, %s216
      $region30: #{_minibatch_std_impl.3} parent=23 // loop_footer_branch
        %215 = sbr.rel target = $region26
      $region31: #{_minibatch_std_impl.3} parent=23 // loop_exit
        _
      %s223 = sshllo.u32 0, %s210
      loop: start=0, step=1, limit=1
      $region32: #{_minibatch_std_impl.3} parent=23 // loop_pre_header
        _
      $region33: #{_minibatch_std_impl.3} parent=23 // loop_header
        %s225 = sphi 0, %s229
        %p226 = scmp.ge.s32.totalorder %s225, 1
        %s230 = sphi %s212, %s212
        %s231 = sphi %s214, %s214
      $region34: #{_minibatch_std_impl.3} parent=23 // loop_header_branch
        %228 = sbr.rel (%p226) target = $region38
      $region35: #{_minibatch_std_impl.3} parent=23 // loop_body
        %v232 = vld [vmem:[%s230] sm:%s223]
        %233 = vst [vmem:[%s231] sm:%s223] %v232
        %v234 = vld [vmem:[%s230 + $0x1] sm:%s223]
        %235 = vst [vmem:[%s231 + $0x8] sm:%s223] %v234
        %v236 = vld [vmem:[%s230 + $0x2] sm:%s223]
        %237 = vst [vmem:[%s231 + $0x10] sm:%s223] %v236
        %v238 = vld [vmem:[%s230 + $0x3] sm:%s223]
        %239 = vst [vmem:[%s231 + $0x18] sm:%s223] %v238
        %v240 = vld [vmem:[%s230 + $0x4] sm:%s223]
        %241 = vst [vmem:[%s231 + $0x20] sm:%s223] %v240
        %v242 = vld [vmem:[%s230 + $0x5] sm:%s223]
        %243 = vst [vmem:[%s231 + $0x28] sm:%s223] %v242
        %v244 = vld [vmem:[%s230 + $0x6] sm:%s223]
        %245 = vst [vmem:[%s231 + $0x30] sm:%s223] %v244
        %v246 = vld [vmem:[%s230 + $0x7] sm:%s223]
        %247 = vst [vmem:[%s231 + $0x38] sm:%s223] %v246
        %v248 = vld [vmem:[%s230 + $0x8] sm:%s223]
        %249 = vst [vmem:[%s231 + $0x40] sm:%s223] %v248
        %v250 = vld [vmem:[%s230 + $0x9] sm:%s223]
        %251 = vst [vmem:[%s231 + $0x48] sm:%s223] %v250
        %v252 = vld [vmem:[%s230 + $0xa] sm:%s223]
        %253 = vst [vmem:[%s231 + $0x50] sm:%s223] %v252
        %v254 = vld [vmem:[%s230 + $0xb] sm:%s223]
        %255 = vst [vmem:[%s231 + $0x58] sm:%s223] %v254
        %v256 = vld [vmem:[%s230 + $0xc] sm:%s223]
        %257 = vst [vmem:[%s231 + $0x60] sm:%s223] %v256
        %v258 = vld [vmem:[%s230 + $0xd] sm:%s223]
        %259 = vst [vmem:[%s231 + $0x68] sm:%s223] %v258
        %v260 = vld [vmem:[%s230 + $0xe] sm:%s223]
        %261 = vst [vmem:[%s231 + $0x70] sm:%s223] %v260
        %v262 = vld [vmem:[%s230 + $0xf] sm:%s223]
        %263 = vst [vmem:[%s231 + $0x78] sm:%s223] %v262
        %v264 = vld [vmem:[%s230 + $0x10] sm:%s223]
        %265 = vst [vmem:[%s231 + $0x80] sm:%s223] %v264
        %v266 = vld [vmem:[%s230 + $0x11] sm:%s223]
        %267 = vst [vmem:[%s231 + $0x88] sm:%s223] %v266
        %v268 = vld [vmem:[%s230 + $0x12] sm:%s223]
        %269 = vst [vmem:[%s231 + $0x90] sm:%s223] %v268
        %v270 = vld [vmem:[%s230 + $0x13] sm:%s223]
        %271 = vst [vmem:[%s231 + $0x98] sm:%s223] %v270
        %v272 = vld [vmem:[%s230 + $0x14] sm:%s223]
        %273 = vst [vmem:[%s231 + $0xa0] sm:%s223] %v272
        %v274 = vld [vmem:[%s230 + $0x15] sm:%s223]
        %275 = vst [vmem:[%s231 + $0xa8] sm:%s223] %v274
        %v276 = vld [vmem:[%s230 + $0x16] sm:%s223]
        %277 = vst [vmem:[%s231 + $0xb0] sm:%s223] %v276
        %v278 = vld [vmem:[%s230 + $0x17] sm:%s223]
        %279 = vst [vmem:[%s231 + $0xb8] sm:%s223] %v278
        %v280 = vld [vmem:[%s230 + $0x18] sm:%s223]
        %281 = vst [vmem:[%s231 + $0xc0] sm:%s223] %v280
        %v282 = vld [vmem:[%s230 + $0x19] sm:%s223]
        %283 = vst [vmem:[%s231 + $0xc8] sm:%s223] %v282
        %v284 = vld [vmem:[%s230 + $0x1a] sm:%s223]
        %285 = vst [vmem:[%s231 + $0xd0] sm:%s223] %v284
        %v286 = vld [vmem:[%s230 + $0x1b] sm:%s223]
        %287 = vst [vmem:[%s231 + $0xd8] sm:%s223] %v286
        %v288 = vld [vmem:[%s230 + $0x1c] sm:%s223]
        %289 = vst [vmem:[%s231 + $0xe0] sm:%s223] %v288
        %v290 = vld [vmem:[%s230 + $0x1d] sm:%s223]
        %291 = vst [vmem:[%s231 + $0xe8] sm:%s223] %v290
        %v292 = vld [vmem:[%s230 + $0x1e] sm:%s223]
        %293 = vst [vmem:[%s231 + $0xf0] sm:%s223] %v292
        %v294 = vld [vmem:[%s230 + $0x1f] sm:%s223]
        %295 = vst [vmem:[%s231 + $0xf8] sm:%s223] %v294
        %v296 = vld [vmem:[%s230 + $0x20] sm:%s223]
        %297 = vst [vmem:[%s231 + $0x100] sm:%s223] %v296
        %v298 = vld [vmem:[%s230 + $0x21] sm:%s223]
        %299 = vst [vmem:[%s231 + $0x108] sm:%s223] %v298
        %v300 = vld [vmem:[%s230 + $0x22] sm:%s223]
        %301 = vst [vmem:[%s231 + $0x110] sm:%s223] %v300
        %v302 = vld [vmem:[%s230 + $0x23] sm:%s223]
        %303 = vst [vmem:[%s231 + $0x118] sm:%s223] %v302
        %v304 = vld [vmem:[%s230 + $0x24] sm:%s223]
        %305 = vst [vmem:[%s231 + $0x120] sm:%s223] %v304
        %v306 = vld [vmem:[%s230 + $0x25] sm:%s223]
        %307 = vst [vmem:[%s231 + $0x128] sm:%s223] %v306
        %v308 = vld [vmem:[%s230 + $0x26] sm:%s223]
        %309 = vst [vmem:[%s231 + $0x130] sm:%s223] %v308
        %v310 = vld [vmem:[%s230 + $0x27] sm:%s223]
        %311 = vst [vmem:[%s231 + $0x138] sm:%s223] %v310
        %v312 = vld [vmem:[%s230 + $0x28] sm:%s223]
        %313 = vst [vmem:[%s231 + $0x140] sm:%s223] %v312
        %v314 = vld [vmem:[%s230 + $0x29] sm:%s223]
        %315 = vst [vmem:[%s231 + $0x148] sm:%s223] %v314
        %v316 = vld [vmem:[%s230 + $0x2a] sm:%s223]
        %317 = vst [vmem:[%s231 + $0x150] sm:%s223] %v316
        %v318 = vld [vmem:[%s230 + $0x2b] sm:%s223]
        %319 = vst [vmem:[%s231 + $0x158] sm:%s223] %v318
        %v320 = vld [vmem:[%s230 + $0x2c] sm:%s223]
        %321 = vst [vmem:[%s231 + $0x160] sm:%s223] %v320
        %v322 = vld [vmem:[%s230 + $0x2d] sm:%s223]
        %323 = vst [vmem:[%s231 + $0x168] sm:%s223] %v322
        %v324 = vld [vmem:[%s230 + $0x2e] sm:%s223]
        %325 = vst [vmem:[%s231 + $0x170] sm:%s223] %v324
        %v326 = vld [vmem:[%s230 + $0x2f] sm:%s223]
        %327 = vst [vmem:[%s231 + $0x178] sm:%s223] %v326
        %v328 = vld [vmem:[%s230 + $0x30] sm:%s223]
        %329 = vst [vmem:[%s231 + $0x180] sm:%s223] %v328
        %v330 = vld [vmem:[%s230 + $0x31] sm:%s223]
        %331 = vst [vmem:[%s231 + $0x188] sm:%s223] %v330
        %v332 = vld [vmem:[%s230 + $0x32] sm:%s223]
        %333 = vst [vmem:[%s231 + $0x190] sm:%s223] %v332
        %v334 = vld [vmem:[%s230 + $0x33] sm:%s223]
        %335 = vst [vmem:[%s231 + $0x198] sm:%s223] %v334
        %v336 = vld [vmem:[%s230 + $0x34] sm:%s223]
        %337 = vst [vmem:[%s231 + $0x1a0] sm:%s223] %v336
        %v338 = vld [vmem:[%s230 + $0x35] sm:%s223]
        %339 = vst [vmem:[%s231 + $0x1a8] sm:%s223] %v338
        %v340 = vld [vmem:[%s230 + $0x36] sm:%s223]
        %341 = vst [vmem:[%s231 + $0x1b0] sm:%s223] %v340
        %v342 = vld [vmem:[%s230 + $0x37] sm:%s223]
        %343 = vst [vmem:[%s231 + $0x1b8] sm:%s223] %v342
        %v344 = vld [vmem:[%s230 + $0x38] sm:%s223]
        %345 = vst [vmem:[%s231 + $0x1c0] sm:%s223] %v344
        %v346 = vld [vmem:[%s230 + $0x39] sm:%s223]
        %347 = vst [vmem:[%s231 + $0x1c8] sm:%s223] %v346
        %v348 = vld [vmem:[%s230 + $0x3a] sm:%s223]
        %349 = vst [vmem:[%s231 + $0x1d0] sm:%s223] %v348
        %v350 = vld [vmem:[%s230 + $0x3b] sm:%s223]
        %351 = vst [vmem:[%s231 + $0x1d8] sm:%s223] %v350
        %v352 = vld [vmem:[%s230 + $0x3c] sm:%s223]
        %353 = vst [vmem:[%s231 + $0x1e0] sm:%s223] %v352
        %v354 = vld [vmem:[%s230 + $0x3d] sm:%s223]
        %355 = vst [vmem:[%s231 + $0x1e8] sm:%s223] %v354
        %v356 = vld [vmem:[%s230 + $0x3e] sm:%s223]
        %357 = vst [vmem:[%s231 + $0x1f0] sm:%s223] %v356
        %v358 = vld [vmem:[%s230 + $0x3f] sm:%s223]
        %359 = vst [vmem:[%s231 + $0x1f8] sm:%s223] %v358
      $region36: #{_minibatch_std_impl.3} parent=23 // loop_footer
        %s229 = sadd.s32 1, %s225
      $region37: #{_minibatch_std_impl.3} parent=23 // loop_footer_branch
        %224 = sbr.rel target = $region33
      $region38: #{_minibatch_std_impl.3} parent=23 // loop_exit
        _
    $region24: #{_minibatch_std_impl.3} parent=8 // pred_fallthru
      _
  $region9: #{_minibatch_std_impl.3} parent=0 // pred_fallthru
    _
  // Predicated region
  $region10: #{_minibatch_std_impl.3} parent=0 // pred_check
    %p65 = pneg %p61
  $region11: #{_minibatch_std_impl.3} parent=0 // pred_check_branch
    %67 = sbr.rel (%p65) target = $region13
  $region12: #{_minibatch_std_impl.3} parent=0 // pred_region
    %s68 = sshllo.u32 0, 1
    loop: start=0, step=1, limit=1
    $region14: #{_minibatch_std_impl.3} parent=12 // loop_pre_header
      _
    $region15: #{_minibatch_std_impl.3} parent=12 // loop_header
      %s70 = sphi 0, %s74
      %p71 = scmp.ge.s32.totalorder %s70, 1
      %s75 = sphi [#allocation2], [#allocation2]
      %s76 = sphi %s59, %s59
    $region16: #{_minibatch_std_impl.3} parent=12 // loop_header_branch
      %73 = sbr.rel (%p71) target = $region20
    $region17: #{_minibatch_std_impl.3} parent=12 // loop_body
      %v77 = vld [vmem:[%s75] sm:%s68]
      %78 = vst [vmem:[%s76] sm:%s68] %v77
      %v79 = vld [vmem:[%s75 + $0x1] sm:%s68]
      %80 = vst [vmem:[%s76 + $0x8] sm:%s68] %v79
      %v81 = vld [vmem:[%s75 + $0x2] sm:%s68]
      %82 = vst [vmem:[%s76 + $0x10] sm:%s68] %v81
      %v83 = vld [vmem:[%s75 + $0x3] sm:%s68]
      %84 = vst [vmem:[%s76 + $0x18] sm:%s68] %v83
      %v85 = vld [vmem:[%s75 + $0x4] sm:%s68]
      %86 = vst [vmem:[%s76 + $0x20] sm:%s68] %v85
      %v87 = vld [vmem:[%s75 + $0x5] sm:%s68]
      %88 = vst [vmem:[%s76 + $0x28] sm:%s68] %v87
      %v89 = vld [vmem:[%s75 + $0x6] sm:%s68]
      %90 = vst [vmem:[%s76 + $0x30] sm:%s68] %v89
      %v91 = vld [vmem:[%s75 + $0x7] sm:%s68]
      %92 = vst [vmem:[%s76 + $0x38] sm:%s68] %v91
      %v93 = vld [vmem:[%s75 + $0x8] sm:%s68]
      %94 = vst [vmem:[%s76 + $0x40] sm:%s68] %v93
      %v95 = vld [vmem:[%s75 + $0x9] sm:%s68]
      %96 = vst [vmem:[%s76 + $0x48] sm:%s68] %v95
      %v97 = vld [vmem:[%s75 + $0xa] sm:%s68]
      %98 = vst [vmem:[%s76 + $0x50] sm:%s68] %v97
      %v99 = vld [vmem:[%s75 + $0xb] sm:%s68]
      %100 = vst [vmem:[%s76 + $0x58] sm:%s68] %v99
      %v101 = vld [vmem:[%s75 + $0xc] sm:%s68]
      %102 = vst [vmem:[%s76 + $0x60] sm:%s68] %v101
      %v103 = vld [vmem:[%s75 + $0xd] sm:%s68]
      %104 = vst [vmem:[%s76 + $0x68] sm:%s68] %v103
      %v105 = vld [vmem:[%s75 + $0xe] sm:%s68]
      %106 = vst [vmem:[%s76 + $0x70] sm:%s68] %v105
      %v107 = vld [vmem:[%s75 + $0xf] sm:%s68]
      %108 = vst [vmem:[%s76 + $0x78] sm:%s68] %v107
      %v109 = vld [vmem:[%s75 + $0x10] sm:%s68]
      %110 = vst [vmem:[%s76 + $0x80] sm:%s68] %v109
      %v111 = vld [vmem:[%s75 + $0x11] sm:%s68]
      %112 = vst [vmem:[%s76 + $0x88] sm:%s68] %v111
      %v113 = vld [vmem:[%s75 + $0x12] sm:%s68]
      %114 = vst [vmem:[%s76 + $0x90] sm:%s68] %v113
      %v115 = vld [vmem:[%s75 + $0x13] sm:%s68]
      %116 = vst [vmem:[%s76 + $0x98] sm:%s68] %v115
      %v117 = vld [vmem:[%s75 + $0x14] sm:%s68]
      %118 = vst [vmem:[%s76 + $0xa0] sm:%s68] %v117
      %v119 = vld [vmem:[%s75 + $0x15] sm:%s68]
      %120 = vst [vmem:[%s76 + $0xa8] sm:%s68] %v119
      %v121 = vld [vmem:[%s75 + $0x16] sm:%s68]
      %122 = vst [vmem:[%s76 + $0xb0] sm:%s68] %v121
      %v123 = vld [vmem:[%s75 + $0x17] sm:%s68]
      %124 = vst [vmem:[%s76 + $0xb8] sm:%s68] %v123
      %v125 = vld [vmem:[%s75 + $0x18] sm:%s68]
      %126 = vst [vmem:[%s76 + $0xc0] sm:%s68] %v125
      %v127 = vld [vmem:[%s75 + $0x19] sm:%s68]
      %128 = vst [vmem:[%s76 + $0xc8] sm:%s68] %v127
      %v129 = vld [vmem:[%s75 + $0x1a] sm:%s68]
      %130 = vst [vmem:[%s76 + $0xd0] sm:%s68] %v129
      %v131 = vld [vmem:[%s75 + $0x1b] sm:%s68]
      %132 = vst [vmem:[%s76 + $0xd8] sm:%s68] %v131
      %v133 = vld [vmem:[%s75 + $0x1c] sm:%s68]
      %134 = vst [vmem:[%s76 + $0xe0] sm:%s68] %v133
      %v135 = vld [vmem:[%s75 + $0x1d] sm:%s68]
      %136 = vst [vmem:[%s76 + $0xe8] sm:%s68] %v135
      %v137 = vld [vmem:[%s75 + $0x1e] sm:%s68]
      %138 = vst [vmem:[%s76 + $0xf0] sm:%s68] %v137
      %v139 = vld [vmem:[%s75 + $0x1f] sm:%s68]
      %140 = vst [vmem:[%s76 + $0xf8] sm:%s68] %v139
      %v141 = vld [vmem:[%s75 + $0x20] sm:%s68]
      %142 = vst [vmem:[%s76 + $0x100] sm:%s68] %v141
      %v143 = vld [vmem:[%s75 + $0x21] sm:%s68]
      %144 = vst [vmem:[%s76 + $0x108] sm:%s68] %v143
      %v145 = vld [vmem:[%s75 + $0x22] sm:%s68]
      %146 = vst [vmem:[%s76 + $0x110] sm:%s68] %v145
      %v147 = vld [vmem:[%s75 + $0x23] sm:%s68]
      %148 = vst [vmem:[%s76 + $0x118] sm:%s68] %v147
      %v149 = vld [vmem:[%s75 + $0x24] sm:%s68]
      %150 = vst [vmem:[%s76 + $0x120] sm:%s68] %v149
      %v151 = vld [vmem:[%s75 + $0x25] sm:%s68]
      %152 = vst [vmem:[%s76 + $0x128] sm:%s68] %v151
      %v153 = vld [vmem:[%s75 + $0x26] sm:%s68]
      %154 = vst [vmem:[%s76 + $0x130] sm:%s68] %v153
      %v155 = vld [vmem:[%s75 + $0x27] sm:%s68]
      %156 = vst [vmem:[%s76 + $0x138] sm:%s68] %v155
      %v157 = vld [vmem:[%s75 + $0x28] sm:%s68]
      %158 = vst [vmem:[%s76 + $0x140] sm:%s68] %v157
      %v159 = vld [vmem:[%s75 + $0x29] sm:%s68]
      %160 = vst [vmem:[%s76 + $0x148] sm:%s68] %v159
      %v161 = vld [vmem:[%s75 + $0x2a] sm:%s68]
      %162 = vst [vmem:[%s76 + $0x150] sm:%s68] %v161
      %v163 = vld [vmem:[%s75 + $0x2b] sm:%s68]
      %164 = vst [vmem:[%s76 + $0x158] sm:%s68] %v163
      %v165 = vld [vmem:[%s75 + $0x2c] sm:%s68]
      %166 = vst [vmem:[%s76 + $0x160] sm:%s68] %v165
      %v167 = vld [vmem:[%s75 + $0x2d] sm:%s68]
      %168 = vst [vmem:[%s76 + $0x168] sm:%s68] %v167
      %v169 = vld [vmem:[%s75 + $0x2e] sm:%s68]
      %170 = vst [vmem:[%s76 + $0x170] sm:%s68] %v169
      %v171 = vld [vmem:[%s75 + $0x2f] sm:%s68]
      %172 = vst [vmem:[%s76 + $0x178] sm:%s68] %v171
      %v173 = vld [vmem:[%s75 + $0x30] sm:%s68]
      %174 = vst [vmem:[%s76 + $0x180] sm:%s68] %v173
      %v175 = vld [vmem:[%s75 + $0x31] sm:%s68]
      %176 = vst [vmem:[%s76 + $0x188] sm:%s68] %v175
      %v177 = vld [vmem:[%s75 + $0x32] sm:%s68]
      %178 = vst [vmem:[%s76 + $0x190] sm:%s68] %v177
      %v179 = vld [vmem:[%s75 + $0x33] sm:%s68]
      %180 = vst [vmem:[%s76 + $0x198] sm:%s68] %v179
      %v181 = vld [vmem:[%s75 + $0x34] sm:%s68]
      %182 = vst [vmem:[%s76 + $0x1a0] sm:%s68] %v181
      %v183 = vld [vmem:[%s75 + $0x35] sm:%s68]
      %184 = vst [vmem:[%s76 + $0x1a8] sm:%s68] %v183
      %v185 = vld [vmem:[%s75 + $0x36] sm:%s68]
      %186 = vst [vmem:[%s76 + $0x1b0] sm:%s68] %v185
      %v187 = vld [vmem:[%s75 + $0x37] sm:%s68]
      %188 = vst [vmem:[%s76 + $0x1b8] sm:%s68] %v187
      %v189 = vld [vmem:[%s75 + $0x38] sm:%s68]
      %190 = vst [vmem:[%s76 + $0x1c0] sm:%s68] %v189
      %v191 = vld [vmem:[%s75 + $0x39] sm:%s68]
      %192 = vst [vmem:[%s76 + $0x1c8] sm:%s68] %v191
      %v193 = vld [vmem:[%s75 + $0x3a] sm:%s68]
      %194 = vst [vmem:[%s76 + $0x1d0] sm:%s68] %v193
      %v195 = vld [vmem:[%s75 + $0x3b] sm:%s68]
      %196 = vst [vmem:[%s76 + $0x1d8] sm:%s68] %v195
      %v197 = vld [vmem:[%s75 + $0x3c] sm:%s68]
      %198 = vst [vmem:[%s76 + $0x1e0] sm:%s68] %v197
      %v199 = vld [vmem:[%s75 + $0x3d] sm:%s68]
      %200 = vst [vmem:[%s76 + $0x1e8] sm:%s68] %v199
      %v201 = vld [vmem:[%s75 + $0x3e] sm:%s68]
      %202 = vst [vmem:[%s76 + $0x1f0] sm:%s68] %v201
      %v203 = vld [vmem:[%s75 + $0x3f] sm:%s68]
      %204 = vst [vmem:[%s76 + $0x1f8] sm:%s68] %v203
    $region18: #{_minibatch_std_impl.3} parent=12 // loop_footer
      %s74 = sadd.s32 1, %s70
    $region19: #{_minibatch_std_impl.3} parent=12 // loop_footer_branch
      %69 = sbr.rel target = $region15
    $region20: #{_minibatch_std_impl.3} parent=12 // loop_exit
      _
  $region13: #{_minibatch_std_impl.3} parent=0 // pred_fallthru
    _
  // Predicated region
  $region39: #{_minibatch_std_impl.3} parent=0 // pred_check
    _
  $region40: #{_minibatch_std_impl.3} parent=0 // pred_check_branch
    %362 = sbr.rel (0) target = $region42
  $region41: #{_minibatch_std_impl.3} parent=0 // pred_region
    %363 = vsyncadd [#allocation3], 1024
  $region42: #{_minibatch_std_impl.3} parent=0 // pred_fallthru
    _
  %s364 = smul.u32 4, 1
  %s365 = smul.u32 %s364, 16
  %s366 = sshll.u32 %s365, 4
  %367 = dma.done [#allocation3], %s366
  %368 = vsyncmov [#allocation3]
  %s369 = vpop.sfrf %368
  %p370 = scmp.eq.s32.totalorder %s369, 0
  %p371 = pneg %p370
  %373 = shalt.err (%p371)

// kernel: _minibatch_std_impl.2
$region0: #{_minibatch_std_impl.2}
  #allocation0 [shape = 'u32[]', space=smem, size = 0x4, offset = 0x4, fixed_abs, tag = 'smem constant byte address 0x4 - core index']
  #allocation1 [shape = 'u32[144,128]{1,0:T(1,128)}', space=vmem, size = 0x12000, scoped, tag = 'internal scratch']
  %s0 = inlined_call_operand.vmem [shape: f32[4,4,2048], index: 0, kind: input, shape index: {}]
  %s1 = inlined_call_operand.vmem [shape: f32[4,5,2048], index: 1, kind: output, shape index: {0}]
  %s2 = inlined_call_operand.vmem [shape: f32[1,2,128], index: 2, kind: output, shape index: {1}]
  %3 = xla_tuple %s1, %s2
  %s4 = sld [smem:[#allocation0]]
  $region26: #{_minibatch_std_impl.2} parent=0
    _
  %s6 = ssub.s32 1, %s4
  %s7 = scalar_select 0, %s6, %s4
  // Predicated region
  $region2: #{_minibatch_std_impl.2} parent=0 // pred_check
    _
  $region3: #{_minibatch_std_impl.2} parent=0 // pred_check_branch
    %9 = sbr.rel (0) target = $region5
  $region4: #{_minibatch_std_impl.2} parent=0 // pred_region
    %s10 = sadd.s32 0, 0
    %s11 = smul.u32 16, %s10
    %p12 = scmp.lt.s32.totalorder %s11, 15
    %s13 = scalar_select %p12, %s11, 15
    %s14 = smul.addr %s13, 4
    %s15 = scalar_lea.vmem %s0, %s14
    %s16 = sadd.s32 0, 0
    %s17 = smul.u32 16, %s16
  $region5: #{_minibatch_std_impl.2} parent=0 // pred_fallthru
    _
  %s18 = sadd.s32 0, 0
  %s19 = smul.u32 16, %s18
  %p20 = scmp.lt.s32.totalorder %s19, 15
  %s21 = scalar_select %p20, %s19, 15
  %s22 = smul.addr %s21, 4
  %s23 = scalar_lea.vmem %s0, %s22
  %s24 = sadd.s32 0, 0
  %s25 = smul.u32 16, %s24
  %p26 = scmp.lt.s32.totalorder %s25, 15
  %s27 = scalar_select %p26, %s25, 15
  %s28 = smul.addr %s27, 8
  %s29 = scalar_lea.vmem %s1, %s28
  %s30 = sadd.s32 0, 0
  %s31 = smul.u32 16, %s30
  %p32 = scmp.lt.s32.totalorder %s31, 15
  %s33 = scalar_select %p32, %s31, 15
  %s34 = smul.addr %s33, 4
  %s35 = scalar_lea.vmem %s0, %s34
  %s36 = sadd.s32 0, 0
  %s37 = smul.u32 16, %s36
  %s38 = sadd.s32 0, 0
  %s39 = smul.u32 16, %s38
  %p40 = scmp.lt.s32.totalorder %s39, 15
  %s41 = scalar_select %p40, %s39, 15
  %s42 = smul.addr %s41, 8
  %s43 = scalar_lea.vmem %s1, %s42
  %s44 = sadd.s32 0, 0
  %s45 = smul.u32 16, %s44
  %v46 = vld [vmem:[%s35] sm:$0xff]
  %v47 = vld [vmem:[%s35 + $0x8] sm:$0xff]
  %v48 = vld [vmem:[%s35 + $0x10] sm:$0xff]
  %v49 = vld [vmem:[%s35 + $0x18] sm:$0xff]
  %v50 = vld [vmem:[%s35 + $0x20] sm:$0xff]
  %v51 = vld [vmem:[%s35 + $0x28] sm:$0xff]
  %v52 = vld [vmem:[%s35 + $0x30] sm:$0xff]
  %v53 = vld [vmem:[%s35 + $0x38] sm:$0xff]
  %v54 = vld [vmem:[%s35 + $0x40] sm:$0xff]
  %v55 = vld [vmem:[%s35 + $0x48] sm:$0xff]
  %v56 = vld [vmem:[%s35 + $0x50] sm:$0xff]
  %v57 = vld [vmem:[%s35 + $0x58] sm:$0xff]
  %v58 = vld [vmem:[%s35 + $0x60] sm:$0xff]
  %v59 = vld [vmem:[%s35 + $0x68] sm:$0xff]
  %v60 = vld [vmem:[%s35 + $0x70] sm:$0xff]
  %v61 = vld [vmem:[%s35 + $0x78] sm:$0xff]
  %v62 = vld [vmem:[%s35 + $0x80] sm:$0xff]
  %v63 = vld [vmem:[%s35 + $0x88] sm:$0xff]
  %v64 = vld [vmem:[%s35 + $0x90] sm:$0xff]
  %v65 = vld [vmem:[%s35 + $0x98] sm:$0xff]
  %v66 = vld [vmem:[%s35 + $0xa0] sm:$0xff]
  %v67 = vld [vmem:[%s35 + $0xa8] sm:$0xff]
  %v68 = vld [vmem:[%s35 + $0xb0] sm:$0xff]
  %v69 = vld [vmem:[%s35 + $0xb8] sm:$0xff]
  %v70 = vld [vmem:[%s35 + $0xc0] sm:$0xff]
  %v71 = vld [vmem:[%s35 + $0xc8] sm:$0xff]
  %v72 = vld [vmem:[%s35 + $0xd0] sm:$0xff]
  %v73 = vld [vmem:[%s35 + $0xd8] sm:$0xff]
  %v74 = vld [vmem:[%s35 + $0xe0] sm:$0xff]
  %v75 = vld [vmem:[%s35 + $0xe8] sm:$0xff]
  %v76 = vld [vmem:[%s35 + $0xf0] sm:$0xff]
  %v77 = vld [vmem:[%s35 + $0xf8] sm:$0xff]
  %v110 = vcombine.high %v46, %v46
  %v111 = vcombine.high %v47, %v47
  %v112 = vcombine.high %v48, %v48
  %v113 = vcombine.high %v49, %v49
  %v114 = vcombine.high %v50, %v50
  %v115 = vcombine.high %v51, %v51
  %v116 = vcombine.high %v52, %v52
  %v117 = vcombine.high %v53, %v53
  %v118 = vcombine.high %v54, %v54
  %v119 = vcombine.high %v55, %v55
  %v120 = vcombine.high %v56, %v56
  %v121 = vcombine.high %v57, %v57
  %v122 = vcombine.high %v58, %v58
  %v123 = vcombine.high %v59, %v59
  %v124 = vcombine.high %v60, %v60
  %v125 = vcombine.high %v61, %v61
  %v126 = vcombine.high %v62, %v62
  %v127 = vcombine.high %v63, %v63
  %v128 = vcombine.high %v64, %v64
  %v129 = vcombine.high %v65, %v65
  %v130 = vcombine.high %v66, %v66
  %v131 = vcombine.high %v67, %v67
  %v132 = vcombine.high %v68, %v68
  %v133 = vcombine.high %v69, %v69
  %v134 = vcombine.high %v70, %v70
  %v135 = vcombine.high %v71, %v71
  %v136 = vcombine.high %v72, %v72
  %v137 = vcombine.high %v73, %v73
  %v138 = vcombine.high %v74, %v74
  %v139 = vcombine.high %v75, %v75
  %v140 = vcombine.high %v76, %v76
  %v141 = vcombine.high %v77, %v77
  %174 = vst [vmem:[%s43] sm:$0xf] %v46
  %175 = vst [vmem:[%s43 + $0x8] sm:$0xf] %v110
  %176 = vst [vmem:[%s43 + $0x10] sm:$0xf] %v47
  %177 = vst [vmem:[%s43 + $0x18] sm:$0xf] %v111
  %178 = vst [vmem:[%s43 + $0x20] sm:$0xf] %v48
  %179 = vst [vmem:[%s43 + $0x28] sm:$0xf] %v112
  %180 = vst [vmem:[%s43 + $0x30] sm:$0xf] %v49
  %181 = vst [vmem:[%s43 + $0x38] sm:$0xf] %v113
  %182 = vst [vmem:[%s43 + $0x40] sm:$0xf] %v50
  %183 = vst [vmem:[%s43 + $0x48] sm:$0xf] %v114
  %184 = vst [vmem:[%s43 + $0x50] sm:$0xf] %v51
  %185 = vst [vmem:[%s43 + $0x58] sm:$0xf] %v115
  %186 = vst [vmem:[%s43 + $0x60] sm:$0xf] %v52
  %187 = vst [vmem:[%s43 + $0x68] sm:$0xf] %v116
  %188 = vst [vmem:[%s43 + $0x70] sm:$0xf] %v53
  %189 = vst [vmem:[%s43 + $0x78] sm:$0xf] %v117
  %190 = vst [vmem:[%s43 + $0x80] sm:$0xf] %v54
  %191 = vst [vmem:[%s43 + $0x88] sm:$0xf] %v118
  %192 = vst [vmem:[%s43 + $0x90] sm:$0xf] %v55
  %193 = vst [vmem:[%s43 + $0x98] sm:$0xf] %v119
  %194 = vst [vmem:[%s43 + $0xa0] sm:$0xf] %v56
  %195 = vst [vmem:[%s43 + $0xa8] sm:$0xf] %v120
  %196 = vst [vmem:[%s43 + $0xb0] sm:$0xf] %v57
  %197 = vst [vmem:[%s43 + $0xb8] sm:$0xf] %v121
  %198 = vst [vmem:[%s43 + $0xc0] sm:$0xf] %v58
  %199 = vst [vmem:[%s43 + $0xc8] sm:$0xf] %v122
  %200 = vst [vmem:[%s43 + $0xd0] sm:$0xf] %v59
  %201 = vst [vmem:[%s43 + $0xd8] sm:$0xf] %v123
  %202 = vst [vmem:[%s43 + $0xe0] sm:$0xf] %v60
  %203 = vst [vmem:[%s43 + $0xe8] sm:$0xf] %v124
  %204 = vst [vmem:[%s43 + $0xf0] sm:$0xf] %v61
  %205 = vst [vmem:[%s43 + $0xf8] sm:$0xf] %v125
  %206 = vst [vmem:[%s43 + $0x100] sm:$0xf] %v62
  %207 = vst [vmem:[%s43 + $0x108] sm:$0xf] %v126
  %208 = vst [vmem:[%s43 + $0x110] sm:$0xf] %v63
  %209 = vst [vmem:[%s43 + $0x118] sm:$0xf] %v127
  %210 = vst [vmem:[%s43 + $0x120] sm:$0xf] %v64
  %211 = vst [vmem:[%s43 + $0x128] sm:$0xf] %v128
  %212 = vst [vmem:[%s43 + $0x130] sm:$0xf] %v65
  %213 = vst [vmem:[%s43 + $0x138] sm:$0xf] %v129
  %214 = vst [vmem:[%s43 + $0x140] sm:$0xf] %v66
  %215 = vst [vmem:[%s43 + $0x148] sm:$0xf] %v130
  %216 = vst [vmem:[%s43 + $0x150] sm:$0xf] %v67
  %217 = vst [vmem:[%s43 + $0x158] sm:$0xf] %v131
  %218 = vst [vmem:[%s43 + $0x160] sm:$0xf] %v68
  %219 = vst [vmem:[%s43 + $0x168] sm:$0xf] %v132
  %220 = vst [vmem:[%s43 + $0x170] sm:$0xf] %v69
  %221 = vst [vmem:[%s43 + $0x178] sm:$0xf] %v133
  %222 = vst [vmem:[%s43 + $0x180] sm:$0xf] %v70
  %223 = vst [vmem:[%s43 + $0x188] sm:$0xf] %v134
  %224 = vst [vmem:[%s43 + $0x190] sm:$0xf] %v71
  %225 = vst [vmem:[%s43 + $0x198] sm:$0xf] %v135
  %226 = vst [vmem:[%s43 + $0x1a0] sm:$0xf] %v72
  %227 = vst [vmem:[%s43 + $0x1a8] sm:$0xf] %v136
  %228 = vst [vmem:[%s43 + $0x1b0] sm:$0xf] %v73
  %229 = vst [vmem:[%s43 + $0x1b8] sm:$0xf] %v137
  %230 = vst [vmem:[%s43 + $0x1c0] sm:$0xf] %v74
  %231 = vst [vmem:[%s43 + $0x1c8] sm:$0xf] %v138
  %232 = vst [vmem:[%s43 + $0x1d0] sm:$0xf] %v75
  %233 = vst [vmem:[%s43 + $0x1d8] sm:$0xf] %v139
  %234 = vst [vmem:[%s43 + $0x1e0] sm:$0xf] %v76
  %235 = vst [vmem:[%s43 + $0x1e8] sm:$0xf] %v140
  %236 = vst [vmem:[%s43 + $0x1f0] sm:$0xf] %v77
  %237 = vst [vmem:[%s43 + $0x1f8] sm:$0xf] %v141
  %s238 = scalar_lea.vmem %s43, 4
  %239 = vst [vmem:[%s238] ss:$8 sm:$0xf] 0.0
  %240 = vst [vmem:[%s238] ss:$8 sm:$0xf0] 0.0
  %s241 = scalar_lea.vmem %s43, 68
  %242 = vst [vmem:[%s241] ss:$8 sm:$0xf] 0.0
  %243 = vst [vmem:[%s241] ss:$8 sm:$0xf0] 0.0
  %s244 = scalar_lea.vmem %s43, 132
  %245 = vst [vmem:[%s244] ss:$8 sm:$0xf] 0.0
  %246 = vst [vmem:[%s244] ss:$8 sm:$0xf0] 0.0
  %s247 = scalar_lea.vmem %s43, 196
  %248 = vst [vmem:[%s247] ss:$8 sm:$0xf] 0.0
  %249 = vst [vmem:[%s247] ss:$8 sm:$0xf0] 0.0
  %s250 = scalar_lea.vmem %s43, 260
  %251 = vst [vmem:[%s250] ss:$8 sm:$0xf] 0.0
  %252 = vst [vmem:[%s250] ss:$8 sm:$0xf0] 0.0
  %s253 = scalar_lea.vmem %s43, 324
  %254 = vst [vmem:[%s253] ss:$8 sm:$0xf] 0.0
  %255 = vst [vmem:[%s253] ss:$8 sm:$0xf0] 0.0
  %s256 = scalar_lea.vmem %s43, 388
  %257 = vst [vmem:[%s256] ss:$8 sm:$0xf] 0.0
  %258 = vst [vmem:[%s256] ss:$8 sm:$0xf0] 0.0
  %s259 = scalar_lea.vmem %s43, 452
  %260 = vst [vmem:[%s259] ss:$8 sm:$0xf] 0.0
  %261 = vst [vmem:[%s259] ss:$8 sm:$0xf0] 0.0
  %v262 = vmul.f32 %v46, %v46
  %v263 = vmul.f32 %v47, %v47
  %v264 = vmul.f32 %v48, %v48
  %v265 = vmul.f32 %v49, %v49
  %v266 = vmul.f32 %v50, %v50
  %v267 = vmul.f32 %v51, %v51
  %v268 = vmul.f32 %v52, %v52
  %v269 = vmul.f32 %v53, %v53
  %v270 = vmul.f32 %v54, %v54
  %v271 = vmul.f32 %v55, %v55
  %v272 = vmul.f32 %v56, %v56
  %v273 = vmul.f32 %v57, %v57
  %v274 = vmul.f32 %v58, %v58
  %v275 = vmul.f32 %v59, %v59
  %v276 = vmul.f32 %v60, %v60
  %v277 = vmul.f32 %v61, %v61
  %v278 = vadd.f32 %v46, %v62
  %v279 = vadd.f32 %v47, %v63
  %v280 = vadd.f32 %v48, %v64
  %v281 = vadd.f32 %v49, %v65
  %v282 = vadd.f32 %v50, %v66
  %v283 = vadd.f32 %v51, %v67
  %v284 = vadd.f32 %v52, %v68
  %v285 = vadd.f32 %v53, %v69
  %v286 = vadd.f32 %v54, %v70
  %v287 = vadd.f32 %v55, %v71
  %v288 = vadd.f32 %v56, %v72
  %v289 = vadd.f32 %v57, %v73
  %v290 = vadd.f32 %v58, %v74
  %v291 = vadd.f32 %v59, %v75
  %v292 = vadd.f32 %v60, %v76
  %v293 = vadd.f32 %v61, %v77
  %v294 = vmul.f32 %v62, %v62
  %v295 = vmul.f32 %v63, %v63
  %v296 = vmul.f32 %v64, %v64
  %v297 = vmul.f32 %v65, %v65
  %v298 = vmul.f32 %v66, %v66
  %v299 = vmul.f32 %v67, %v67
  %v300 = vmul.f32 %v68, %v68
  %v301 = vmul.f32 %v69, %v69
  %v302 = vmul.f32 %v70, %v70
  %v303 = vmul.f32 %v71, %v71
  %v304 = vmul.f32 %v72, %v72
  %v305 = vmul.f32 %v73, %v73
  %v306 = vmul.f32 %v74, %v74
  %v307 = vmul.f32 %v75, %v75
  %v308 = vmul.f32 %v76, %v76
  %v309 = vmul.f32 %v77, %v77
  %v310 = vadd.f32 %v262, %v294
  %v311 = vadd.f32 %v263, %v295
  %v312 = vadd.f32 %v264, %v296
  %v313 = vadd.f32 %v265, %v297
  %v314 = vadd.f32 %v266, %v298
  %v315 = vadd.f32 %v267, %v299
  %v316 = vadd.f32 %v268, %v300
  %v317 = vadd.f32 %v269, %v301
  %v318 = vadd.f32 %v270, %v302
  %v319 = vadd.f32 %v271, %v303
  %v320 = vadd.f32 %v272, %v304
  %v321 = vadd.f32 %v273, %v305
  %v322 = vadd.f32 %v274, %v306
  %v323 = vadd.f32 %v275, %v307
  %v324 = vadd.f32 %v276, %v308
  %v325 = vadd.f32 %v277, %v309
  %v326 = vmul.f32 %v278, 0.5
  %v327 = vmul.f32 %v279, 0.5
  %v328 = vmul.f32 %v280, 0.5
  %v329 = vmul.f32 %v281, 0.5
  %v330 = vmul.f32 %v282, 0.5
  %v331 = vmul.f32 %v283, 0.5
  %v332 = vmul.f32 %v284, 0.5
  %v333 = vmul.f32 %v285, 0.5
  %v334 = vmul.f32 %v286, 0.5
  %v335 = vmul.f32 %v287, 0.5
  %v336 = vmul.f32 %v288, 0.5
  %v337 = vmul.f32 %v289, 0.5
  %v338 = vmul.f32 %v290, 0.5
  %v339 = vmul.f32 %v291, 0.5
  %v340 = vmul.f32 %v292, 0.5
  %v341 = vmul.f32 %v293, 0.5
  %v342 = vmul.f32 %v310, 0.5
  %v343 = vmul.f32 %v311, 0.5
  %v344 = vmul.f32 %v312, 0.5
  %v345 = vmul.f32 %v313, 0.5
  %v346 = vmul.f32 %v314, 0.5
  %v347 = vmul.f32 %v315, 0.5
  %v348 = vmul.f32 %v316, 0.5
  %v349 = vmul.f32 %v317, 0.5
  %v350 = vmul.f32 %v318, 0.5
  %v351 = vmul.f32 %v319, 0.5
  %v352 = vmul.f32 %v320, 0.5
  %v353 = vmul.f32 %v321, 0.5
  %v354 = vmul.f32 %v322, 0.5
  %v355 = vmul.f32 %v323, 0.5
  %v356 = vmul.f32 %v324, 0.5
  %v357 = vmul.f32 %v325, 0.5
  %v358 = vmul.f32 %v326, %v326
  %v359 = vmul.f32 %v327, %v327
  %v360 = vmul.f32 %v328, %v328
  %v361 = vmul.f32 %v329, %v329
  %v362 = vmul.f32 %v330, %v330
  %v363 = vmul.f32 %v331, %v331
  %v364 = vmul.f32 %v332, %v332
  %v365 = vmul.f32 %v333, %v333
  %v366 = vmul.f32 %v334, %v334
  %v367 = vmul.f32 %v335, %v335
  %v368 = vmul.f32 %v336, %v336
  %v369 = vmul.f32 %v337, %v337
  %v370 = vmul.f32 %v338, %v338
  %v371 = vmul.f32 %v339, %v339
  %v372 = vmul.f32 %v340, %v340
  %v373 = vmul.f32 %v341, %v341
  %v374 = vsub.f32 %v342, %v358
  %v375 = vsub.f32 %v343, %v359
  %v376 = vsub.f32 %v344, %v360
  %v377 = vsub.f32 %v345, %v361
  %v378 = vsub.f32 %v346, %v362
  %v379 = vsub.f32 %v347, %v363
  %v380 = vsub.f32 %v348, %v364
  %v381 = vsub.f32 %v349, %v365
  %v382 = vsub.f32 %v350, %v366
  %v383 = vsub.f32 %v351, %v367
  %v384 = vsub.f32 %v352, %v368
  %v385 = vsub.f32 %v353, %v369
  %v386 = vsub.f32 %v354, %v370
  %v387 = vsub.f32 %v355, %v371
  %v388 = vsub.f32 %v356, %v372
  %v389 = vsub.f32 %v357, %v373
  %v390 = vmax.f32 %v374, 0.0
  %v391 = vmax.f32 %v375, 0.0
  %v392 = vmax.f32 %v376, 0.0
  %v393 = vmax.f32 %v377, 0.0
  %v394 = vmax.f32 %v378, 0.0
  %v395 = vmax.f32 %v379, 0.0
  %v396 = vmax.f32 %v380, 0.0
  %v397 = vmax.f32 %v381, 0.0
  %v398 = vmax.f32 %v382, 0.0
  %v399 = vmax.f32 %v383, 0.0
  %v400 = vmax.f32 %v384, 0.0
  %v401 = vmax.f32 %v385, 0.0
  %v402 = vmax.f32 %v386, 0.0
  %v403 = vmax.f32 %v387, 0.0
  %v404 = vmax.f32 %v388, 0.0
  %v405 = vmax.f32 %v389, 0.0
  %v406 = vadd.f32 %v390, 1e-08
  %v407 = vadd.f32 %v391, 1e-08
  %v408 = vadd.f32 %v392, 1e-08
  %v409 = vadd.f32 %v393, 1e-08
  %v410 = vadd.f32 %v394, 1e-08
  %v411 = vadd.f32 %v395, 1e-08
  %v412 = vadd.f32 %v396, 1e-08
  %v413 = vadd.f32 %v397, 1e-08
  %v414 = vadd.f32 %v398, 1e-08
  %v415 = vadd.f32 %v399, 1e-08
  %v416 = vadd.f32 %v400, 1e-08
  %v417 = vadd.f32 %v401, 1e-08
  %v418 = vadd.f32 %v402, 1e-08
  %v419 = vadd.f32 %v403, 1e-08
  %v420 = vadd.f32 %v404, 1e-08
  %v421 = vadd.f32 %v405, 1e-08
  %v422 = vrsqrt.pop %v406
  %v423 = vmul.f32 %v406, %v422
  %vm424 = vcmp.eq.f32.partialorder %v406, inf
  %v425 = vsel %vm424, %v406, %v423
  %vm426 = vcmp.eq.f32.partialorder %v406, 0.0
  %v427 = vand.u32 %v406, 2147483648
  %v428 = vsel %vm426, %v427, %v425
  %v429 = vrsqrt.pop %v407
  %v430 = vmul.f32 %v407, %v429
  %vm431 = vcmp.eq.f32.partialorder %v407, inf
  %v432 = vsel %vm431, %v407, %v430
  %vm433 = vcmp.eq.f32.partialorder %v407, 0.0
  %v434 = vand.u32 %v407, 2147483648
  %v435 = vsel %vm433, %v434, %v432
  %v436 = vrsqrt.pop %v408
  %v437 = vmul.f32 %v408, %v436
  %vm438 = vcmp.eq.f32.partialorder %v408, inf
  %v439 = vsel %vm438, %v408, %v437
  %vm440 = vcmp.eq.f32.partialorder %v408, 0.0
  %v441 = vand.u32 %v408, 2147483648
  %v442 = vsel %vm440, %v441, %v439
  %v443 = vrsqrt.pop %v409
  %v444 = vmul.f32 %v409, %v443
  %vm445 = vcmp.eq.f32.partialorder %v409, inf
  %v446 = vsel %vm445, %v409, %v444
  %vm447 = vcmp.eq.f32.partialorder %v409, 0.0
  %v448 = vand.u32 %v409, 2147483648
  %v449 = vsel %vm447, %v448, %v446
  %v450 = vrsqrt.pop %v410
  %v451 = vmul.f32 %v410, %v450
  %vm452 = vcmp.eq.f32.partialorder %v410, inf
  %v453 = vsel %vm452, %v410, %v451
  %vm454 = vcmp.eq.f32.partialorder %v410, 0.0
  %v455 = vand.u32 %v410, 2147483648
  %v456 = vsel %vm454, %v455, %v453
  %v457 = vrsqrt.pop %v411
  %v458 = vmul.f32 %v411, %v457
  %vm459 = vcmp.eq.f32.partialorder %v411, inf
  %v460 = vsel %vm459, %v411, %v458
  %vm461 = vcmp.eq.f32.partialorder %v411, 0.0
  %v462 = vand.u32 %v411, 2147483648
  %v463 = vsel %vm461, %v462, %v460
  %v464 = vrsqrt.pop %v412
  %v465 = vmul.f32 %v412, %v464
  %vm466 = vcmp.eq.f32.partialorder %v412, inf
  %v467 = vsel %vm466, %v412, %v465
  %vm468 = vcmp.eq.f32.partialorder %v412, 0.0
  %v469 = vand.u32 %v412, 2147483648
  %v470 = vsel %vm468, %v469, %v467
  %v471 = vrsqrt.pop %v413
  %v472 = vmul.f32 %v413, %v471
  %vm473 = vcmp.eq.f32.partialorder %v413, inf
  %v474 = vsel %vm473, %v413, %v472
  %vm475 = vcmp.eq.f32.partialorder %v413, 0.0
  %v476 = vand.u32 %v413, 2147483648
  %v477 = vsel %vm475, %v476, %v474
  %v478 = vrsqrt.pop %v414
  %v479 = vmul.f32 %v414, %v478
  %vm480 = vcmp.eq.f32.partialorder %v414, inf
  %v481 = vsel %vm480, %v414, %v479
  %vm482 = vcmp.eq.f32.partialorder %v414, 0.0
  %v483 = vand.u32 %v414, 2147483648
  %v484 = vsel %vm482, %v483, %v481
  %v485 = vrsqrt.pop %v415
  %v486 = vmul.f32 %v415, %v485
  %vm487 = vcmp.eq.f32.partialorder %v415, inf
  %v488 = vsel %vm487, %v415, %v486
  %vm489 = vcmp.eq.f32.partialorder %v415, 0.0
  %v490 = vand.u32 %v415, 2147483648
  %v491 = vsel %vm489, %v490, %v488
  %v492 = vrsqrt.pop %v416
  %v493 = vmul.f32 %v416, %v492
  %vm494 = vcmp.eq.f32.partialorder %v416, inf
  %v495 = vsel %vm494, %v416, %v493
  %vm496 = vcmp.eq.f32.partialorder %v416, 0.0
  %v497 = vand.u32 %v416, 2147483648
  %v498 = vsel %vm496, %v497, %v495
  %v499 = vrsqrt.pop %v417
  %v500 = vmul.f32 %v417, %v499
  %vm501 = vcmp.eq.f32.partialorder %v417, inf
  %v502 = vsel %vm501, %v417, %v500
  %vm503 = vcmp.eq.f32.partialorder %v417, 0.0
  %v504 = vand.u32 %v417, 2147483648
  %v505 = vsel %vm503, %v504, %v502
  %v506 = vrsqrt.pop %v418
  %v507 = vmul.f32 %v418, %v506
  %vm508 = vcmp.eq.f32.partialorder %v418, inf
  %v509 = vsel %vm508, %v418, %v507
  %vm510 = vcmp.eq.f32.partialorder %v418, 0.0
  %v511 = vand.u32 %v418, 2147483648
  %v512 = vsel %vm510, %v511, %v509
  %v513 = vrsqrt.pop %v419
  %v514 = vmul.f32 %v419, %v513
  %vm515 = vcmp.eq.f32.partialorder %v419, inf
  %v516 = vsel %vm515, %v419, %v514
  %vm517 = vcmp.eq.f32.partialorder %v419, 0.0
  %v518 = vand.u32 %v419, 2147483648
  %v519 = vsel %vm517, %v518, %v516
  %v520 = vrsqrt.pop %v420
  %v521 = vmul.f32 %v420, %v520
  %vm522 = vcmp.eq.f32.partialorder %v420, inf
  %v523 = vsel %vm522, %v420, %v521
  %vm524 = vcmp.eq.f32.partialorder %v420, 0.0
  %v525 = vand.u32 %v420, 2147483648
  %v526 = vsel %vm524, %v525, %v523
  %v527 = vrsqrt.pop %v421
  %v528 = vmul.f32 %v421, %v527
  %vm529 = vcmp.eq.f32.partialorder %v421, inf
  %v530 = vsel %vm529, %v421, %v528
  %vm531 = vcmp.eq.f32.partialorder %v421, 0.0
  %v532 = vand.u32 %v421, 2147483648
  %v533 = vsel %vm531, %v532, %v530
  %p534 = scmp.eq.s32.totalorder 0, 0
  // Predicated region
  $region6: #{_minibatch_std_impl.2} parent=0 // pred_check
    %p535 = pneg %p534
  $region7: #{_minibatch_std_impl.2} parent=0 // pred_check_branch
    %537 = sbr.rel (%p535) target = $region9
  $region8: #{_minibatch_std_impl.2} parent=0 // pred_region
    %538 = vst [vmem:[%s2] sm:$0x3] 0.0
  $region9: #{_minibatch_std_impl.2} parent=0 // pred_fallthru
    _
  %v555 = vcombine.high %v428, %v428
  %v556 = vcombine.high %v435, %v435
  %v557 = vcombine.high %v442, %v442
  %v558 = vcombine.high %v449, %v449
  %v559 = vcombine.high %v456, %v456
  %v560 = vcombine.high %v463, %v463
  %v561 = vcombine.high %v470, %v470
  %v562 = vcombine.high %v477, %v477
  %v563 = vcombine.high %v484, %v484
  %v564 = vcombine.high %v491, %v491
  %v565 = vcombine.high %v498, %v498
  %v566 = vcombine.high %v505, %v505
  %v567 = vcombine.high %v512, %v512
  %v568 = vcombine.high %v519, %v519
  %v569 = vcombine.high %v526, %v526
  %v570 = vcombine.high %v533, %v533
  %vm587 = vcmask 1043456
  %v588 = vsel %vm587, %v428, 0.0
  %v589 = vrot.slane %v588, 4
  %v590 = vadd.f32 %v588, %v589
  %v591 = vrot.slane %v590, 2
  %v592 = vadd.f32 %v590, %v591
  %v593 = vrot.slane %v592, 1
  %v594 = vadd.f32 %v592, %v593
  %v595 = vsel %vm587, %v555, 0.0
  %v596 = vrot.slane %v595, 4
  %v597 = vadd.f32 %v595, %v596
  %v598 = vrot.slane %v597, 2
  %v599 = vadd.f32 %v597, %v598
  %v600 = vrot.slane %v599, 1
  %v601 = vadd.f32 %v599, %v600
  %v602 = vsel %vm587, %v435, 0.0
  %v603 = vrot.slane %v602, 4
  %v604 = vadd.f32 %v602, %v603
  %v605 = vrot.slane %v604, 2
  %v606 = vadd.f32 %v604, %v605
  %v607 = vrot.slane %v606, 1
  %v608 = vadd.f32 %v606, %v607
  %v609 = vsel %vm587, %v556, 0.0
  %v610 = vrot.slane %v609, 4
  %v611 = vadd.f32 %v609, %v610
  %v612 = vrot.slane %v611, 2
  %v613 = vadd.f32 %v611, %v612
  %v614 = vrot.slane %v613, 1
  %v615 = vadd.f32 %v613, %v614
  %v616 = vsel %vm587, %v442, 0.0
  %v617 = vrot.slane %v616, 4
  %v618 = vadd.f32 %v616, %v617
  %v619 = vrot.slane %v618, 2
  %v620 = vadd.f32 %v618, %v619
  %v621 = vrot.slane %v620, 1
  %v622 = vadd.f32 %v620, %v621
  %v623 = vsel %vm587, %v557, 0.0
  %v624 = vrot.slane %v623, 4
  %v625 = vadd.f32 %v623, %v624
  %v626 = vrot.slane %v625, 2
  %v627 = vadd.f32 %v625, %v626
  %v628 = vrot.slane %v627, 1
  %v629 = vadd.f32 %v627, %v628
  %v630 = vsel %vm587, %v449, 0.0
  %v631 = vrot.slane %v630, 4
  %v632 = vadd.f32 %v630, %v631
  %v633 = vrot.slane %v632, 2
  %v634 = vadd.f32 %v632, %v633
  %v635 = vrot.slane %v634, 1
  %v636 = vadd.f32 %v634, %v635
  %v637 = vsel %vm587, %v558, 0.0
  %v638 = vrot.slane %v637, 4
  %v639 = vadd.f32 %v637, %v638
  %v640 = vrot.slane %v639, 2
  %v641 = vadd.f32 %v639, %v640
  %v642 = vrot.slane %v641, 1
  %v643 = vadd.f32 %v641, %v642
  %v644 = vsel %vm587, %v456, 0.0
  %v645 = vrot.slane %v644, 4
  %v646 = vadd.f32 %v644, %v645
  %v647 = vrot.slane %v646, 2
  %v648 = vadd.f32 %v646, %v647
  %v649 = vrot.slane %v648, 1
  %v650 = vadd.f32 %v648, %v649
  %v651 = vsel %vm587, %v559, 0.0
  %v652 = vrot.slane %v651, 4
  %v653 = vadd.f32 %v651, %v652
  %v654 = vrot.slane %v653, 2
  %v655 = vadd.f32 %v653, %v654
  %v656 = vrot.slane %v655, 1
  %v657 = vadd.f32 %v655, %v656
  %v658 = vsel %vm587, %v463, 0.0
  %v659 = vrot.slane %v658, 4
  %v660 = vadd.f32 %v658, %v659
  %v661 = vrot.slane %v660, 2
  %v662 = vadd.f32 %v660, %v661
  %v663 = vrot.slane %v662, 1
  %v664 = vadd.f32 %v662, %v663
  %v665 = vsel %vm587, %v560, 0.0
  %v666 = vrot.slane %v665, 4
  %v667 = vadd.f32 %v665, %v666
  %v668 = vrot.slane %v667, 2
  %v669 = vadd.f32 %v667, %v668
  %v670 = vrot.slane %v669, 1
  %v671 = vadd.f32 %v669, %v670
  %v672 = vsel %vm587, %v470, 0.0
  %v673 = vrot.slane %v672, 4
  %v674 = vadd.f32 %v672, %v673
  %v675 = vrot.slane %v674, 2
  %v676 = vadd.f32 %v674, %v675
  %v677 = vrot.slane %v676, 1
  %v678 = vadd.f32 %v676, %v677
  %v679 = vsel %vm587, %v561, 0.0
  %v680 = vrot.slane %v679, 4
  %v681 = vadd.f32 %v679, %v680
  %v682 = vrot.slane %v681, 2
  %v683 = vadd.f32 %v681, %v682
  %v684 = vrot.slane %v683, 1
  %v685 = vadd.f32 %v683, %v684
  %v686 = vsel %vm587, %v477, 0.0
  %v687 = vrot.slane %v686, 4
  %v688 = vadd.f32 %v686, %v687
  %v689 = vrot.slane %v688, 2
  %v690 = vadd.f32 %v688, %v689
  %v691 = vrot.slane %v690, 1
  %v692 = vadd.f32 %v690, %v691
  %v693 = vsel %vm587, %v562, 0.0
  %v694 = vrot.slane %v693, 4
  %v695 = vadd.f32 %v693, %v694
  %v696 = vrot.slane %v695, 2
  %v697 = vadd.f32 %v695, %v696
  %v698 = vrot.slane %v697, 1
  %v699 = vadd.f32 %v697, %v698
  %v700 = vsel %vm587, %v484, 0.0
  %v701 = vrot.slane %v700, 4
  %v702 = vadd.f32 %v700, %v701
  %v703 = vrot.slane %v702, 2
  %v704 = vadd.f32 %v702, %v703
  %v705 = vrot.slane %v704, 1
  %v706 = vadd.f32 %v704, %v705
  %v707 = vsel %vm587, %v563, 0.0
  %v708 = vrot.slane %v707, 4
  %v709 = vadd.f32 %v707, %v708
  %v710 = vrot.slane %v709, 2
  %v711 = vadd.f32 %v709, %v710
  %v712 = vrot.slane %v711, 1
  %v713 = vadd.f32 %v711, %v712
  %v714 = vsel %vm587, %v491, 0.0
  %v715 = vrot.slane %v714, 4
  %v716 = vadd.f32 %v714, %v715
  %v717 = vrot.slane %v716, 2
  %v718 = vadd.f32 %v716, %v717
  %v719 = vrot.slane %v718, 1
  %v720 = vadd.f32 %v718, %v719
  %v721 = vsel %vm587, %v564, 0.0
  %v722 = vrot.slane %v721, 4
  %v723 = vadd.f32 %v721, %v722
  %v724 = vrot.slane %v723, 2
  %v725 = vadd.f32 %v723, %v724
  %v726 = vrot.slane %v725, 1
  %v727 = vadd.f32 %v725, %v726
  %v728 = vsel %vm587, %v498, 0.0
  %v729 = vrot.slane %v728, 4
  %v730 = vadd.f32 %v728, %v729
  %v731 = vrot.slane %v730, 2
  %v732 = vadd.f32 %v730, %v731
  %v733 = vrot.slane %v732, 1
  %v734 = vadd.f32 %v732, %v733
  %v735 = vsel %vm587, %v565, 0.0
  %v736 = vrot.slane %v735, 4
  %v737 = vadd.f32 %v735, %v736
  %v738 = vrot.slane %v737, 2
  %v739 = vadd.f32 %v737, %v738
  %v740 = vrot.slane %v739, 1
  %v741 = vadd.f32 %v739, %v740
  %v742 = vsel %vm587, %v505, 0.0
  %v743 = vrot.slane %v742, 4
  %v744 = vadd.f32 %v742, %v743
  %v745 = vrot.slane %v744, 2
  %v746 = vadd.f32 %v744, %v745
  %v747 = vrot.slane %v746, 1
  %v748 = vadd.f32 %v746, %v747
  %v749 = vsel %vm587, %v566, 0.0
  %v750 = vrot.slane %v749, 4
  %v751 = vadd.f32 %v749, %v750
  %v752 = vrot.slane %v751, 2
  %v753 = vadd.f32 %v751, %v752
  %v754 = vrot.slane %v753, 1
  %v755 = vadd.f32 %v753, %v754
  %v756 = vsel %vm587, %v512, 0.0
  %v757 = vrot.slane %v756, 4
  %v758 = vadd.f32 %v756, %v757
  %v759 = vrot.slane %v758, 2
  %v760 = vadd.f32 %v758, %v759
  %v761 = vrot.slane %v760, 1
  %v762 = vadd.f32 %v760, %v761
  %v763 = vsel %vm587, %v567, 0.0
  %v764 = vrot.slane %v763, 4
  %v765 = vadd.f32 %v763, %v764
  %v766 = vrot.slane %v765, 2
  %v767 = vadd.f32 %v765, %v766
  %v768 = vrot.slane %v767, 1
  %v769 = vadd.f32 %v767, %v768
  %v770 = vsel %vm587, %v519, 0.0
  %v771 = vrot.slane %v770, 4
  %v772 = vadd.f32 %v770, %v771
  %v773 = vrot.slane %v772, 2
  %v774 = vadd.f32 %v772, %v773
  %v775 = vrot.slane %v774, 1
  %v776 = vadd.f32 %v774, %v775
  %v777 = vsel %vm587, %v568, 0.0
  %v778 = vrot.slane %v777, 4
  %v779 = vadd.f32 %v777, %v778
  %v780 = vrot.slane %v779, 2
  %v781 = vadd.f32 %v779, %v780
  %v782 = vrot.slane %v781, 1
  %v783 = vadd.f32 %v781, %v782
  %v784 = vsel %vm587, %v526, 0.0
  %v785 = vrot.slane %v784, 4
  %v786 = vadd.f32 %v784, %v785
  %v787 = vrot.slane %v786, 2
  %v788 = vadd.f32 %v786, %v787
  %v789 = vrot.slane %v788, 1
  %v790 = vadd.f32 %v788, %v789
  %v791 = vsel %vm587, %v569, 0.0
  %v792 = vrot.slane %v791, 4
  %v793 = vadd.f32 %v791, %v792
  %v794 = vrot.slane %v793, 2
  %v795 = vadd.f32 %v793, %v794
  %v796 = vrot.slane %v795, 1
  %v797 = vadd.f32 %v795, %v796
  %v798 = vsel %vm587, %v533, 0.0
  %v799 = vrot.slane %v798, 4
  %v800 = vadd.f32 %v798, %v799
  %v801 = vrot.slane %v800, 2
  %v802 = vadd.f32 %v800, %v801
  %v803 = vrot.slane %v802, 1
  %v804 = vadd.f32 %v802, %v803
  %v805 = vsel %vm587, %v570, 0.0
  %v806 = vrot.slane %v805, 4
  %v807 = vadd.f32 %v805, %v806
  %v808 = vrot.slane %v807, 2
  %v809 = vadd.f32 %v807, %v808
  %v810 = vrot.slane %v809, 1
  %v811 = vadd.f32 %v809, %v810
  %v812 = vadd.f32 %v594, %v601
  %v813 = vadd.f32 %v706, %v713
  %v814 = vadd.f32 %v812, %v608
  %v815 = vadd.f32 %v813, %v720
  %v816 = vadd.f32 %v814, %v615
  %v817 = vadd.f32 %v815, %v727
  %v818 = vadd.f32 %v816, %v622
  %v819 = vadd.f32 %v817, %v734
  %v820 = vadd.f32 %v818, %v629
  %v821 = vadd.f32 %v819, %v741
  %v822 = vadd.f32 %v820, %v636
  %v823 = vadd.f32 %v821, %v748
  %v824 = vadd.f32 %v822, %v643
  %v825 = vadd.f32 %v823, %v755
  %v826 = vadd.f32 %v824, %v650
  %v827 = vadd.f32 %v825, %v762
  %v828 = vadd.f32 %v826, %v657
  %v829 = vadd.f32 %v827, %v769
  %v830 = vadd.f32 %v828, %v664
  %v831 = vadd.f32 %v829, %v776
  %v832 = vadd.f32 %v830, %v671
  %v833 = vadd.f32 %v831, %v783
  %v834 = vadd.f32 %v832, %v678
  %v835 = vadd.f32 %v833, %v790
  %v836 = vadd.f32 %v834, %v685
  %v837 = vadd.f32 %v835, %v797
  %v838 = vadd.f32 %v836, %v692
  %v839 = vadd.f32 %v837, %v804
  %v840 = vadd.f32 %v838, %v699
  %v841 = vadd.f32 %v839, %v811
  %v842 = vld [vmem:[%s2] sm:$0x3]
  %vm845 = vcmask 1041409
  %v846 = vsel %vm845, %v841, %v840
  %v848 = vadd.f32 %v842, %v846
  %849 = vst [vmem:[%s2] sm:$0x3] %v848
  %s850 = sadd.s32 0, 0
  %s851 = smul.u32 16, %s850
  %p852 = scmp.lt.s32.totalorder %s851, 15
  %s853 = scalar_select %p852, %s851, 15
  %s854 = smul.addr %s853, 8
  %s855 = scalar_lea.vmem %s1, %s854
  // Predicated region
  $region10: #{_minibatch_std_impl.2} parent=0 // pred_check
    _
  $region11: #{_minibatch_std_impl.2} parent=0 // pred_check_branch
    %857 = sbr.rel (0) target = $region13
  $region12: #{_minibatch_std_impl.2} parent=0 // pred_region
    %s858 = sadd.s32 0, 0
    %s859 = smul.u32 16, %s858
  $region13: #{_minibatch_std_impl.2} parent=0 // pred_fallthru
    _
  // Predicated region
  $region14: #{_minibatch_std_impl.2} parent=0 // pred_check
    _
  $region15: #{_minibatch_std_impl.2} parent=0 // pred_check_branch
    %861 = sbr.rel (0) target = $region17
  $region16: #{_minibatch_std_impl.2} parent=0 // pred_region
    _
  $region17: #{_minibatch_std_impl.2} parent=0 // pred_fallthru
    _
  // Predicated region
  $region18: #{_minibatch_std_impl.2} parent=0 // pred_check
    _
  $region19: #{_minibatch_std_impl.2} parent=0 // pred_check_branch
    %863 = sbr.rel (0) target = $region21
  $region20: #{_minibatch_std_impl.2} parent=0 // pred_region
    %s864 = sadd.s32 0, 0
    %s865 = smul.u32 16, %s864
    %p866 = scmp.lt.s32.totalorder %s865, 15
    %s867 = scalar_select %p866, %s865, 15
    %s868 = smul.addr %s867, 8
    %s869 = scalar_lea.vmem %s1, %s868
  $region21: #{_minibatch_std_impl.2} parent=0 // pred_fallthru
    _
  // Predicated region
  $region22: #{_minibatch_std_impl.2} parent=0 // pred_check
    _
  $region23: #{_minibatch_std_impl.2} parent=0 // pred_check_branch
    %871 = sbr.rel (0) target = $region25
  $region24: #{_minibatch_std_impl.2} parent=0 // pred_region
    _
  $region25: #{_minibatch_std_impl.2} parent=0 // pred_fallthru
    _

</llo_original>
